<compile_context>
chip_gen: v5e
topology: v5e:2x2
jax: 0.10.0
libtpu: 0.0.40
codegen_flags: <defaults>
</compile_context>

<pallas_src>
import functools

import jax
import jax.numpy as jnp
from jax.experimental import pallas as pl
from jax.experimental.pallas import tpu as pltpu

BN_EPS = 1e-5
LANE = 128


def _round_up(x, m):
    return (x + m - 1) // m * m


# -----------------------------------------------------------------------------
# Pass 1: tiled GEMM (bf16 operands, f32 accumulation) + per-tile BN sums.
# -----------------------------------------------------------------------------
def _gemm_stats_kernel(p_ref, w_ref, y_ref, s1_ref, s2_ref, acc_ref):
    # p_ref:  [tm, tk]      bf16   (im2col patches tile)
    # w_ref:  [tk, OC_pad]  bf16   (weight tile)
    # y_ref:  [tm, OC_pad]  f32    (raw conv output tile)
    # s1/s2:  [8, OC_pad]   f32    (per-M-tile sum y / sum y^2, row-broadcast)
    # acc_ref:[tm, OC_pad]  f32    (VMEM accumulator scratch)
    k = pl.program_id(1)

    @pl.when(k == 0)
    def _():
        acc_ref[...] = jnp.zeros_like(acc_ref)

    acc_ref[...] += jnp.dot(p_ref[...], w_ref[...],
                            preferred_element_type=jnp.float32)

    @pl.when(k == pl.num_programs(1) - 1)
    def _():
        y = acc_ref[...]
        y_ref[...] = y
        s1 = jnp.sum(y, axis=0, keepdims=True)        # [1, OC_pad]
        s2 = jnp.sum(y * y, axis=0, keepdims=True)    # [1, OC_pad]
        s1_ref[...] = jnp.broadcast_to(s1, s1_ref.shape)
        s2_ref[...] = jnp.broadcast_to(s2, s2_ref.shape)


# -----------------------------------------------------------------------------
# Pass 2: folded BN affine (y*scale + shift) + ReLU, in place over y.
# -----------------------------------------------------------------------------
def _bn_relu_kernel(y_ref, scale_ref, shift_ref, o_ref):
    z = y_ref[...] * scale_ref[...] + shift_ref[...]
    o_ref[...] = jnp.maximum(z, 0.0).astype(o_ref.dtype)


def _im2col(x, kh, kw, stride, padding, dilation):
    """NCHW -> [N*OH*OW, C*KH*KW] with (C, KH, KW) flattening (PyTorch order)."""
    n, c, h, w = x.shape
    xp = jnp.pad(x, ((0, 0), (0, 0), (padding, padding), (padding, padding)))
    oh = (h + 2 * padding - dilation * (kh - 1) - 1) // stride + 1
    ow = (w + 2 * padding - dilation * (kw - 1) - 1) // stride + 1
    cols = []
    for i in range(kh):
        for j in range(kw):
            patch = xp[:, :,
                       i * dilation: i * dilation + stride * oh: stride,
                       j * dilation: j * dilation + stride * ow: stride]
            cols.append(patch)                          # [N, C, OH, OW]
    col = jnp.stack(cols, axis=2)                       # [N, C, KH*KW, OH, OW]
    col = col.reshape(n, c * kh * kw, oh, ow)
    col = col.transpose(0, 2, 3, 1).reshape(n * oh * ow, c * kh * kw)
    return col, oh, ow


@functools.partial(jax.jit,
                   static_argnames=("stride", "padding", "dilation", "tm", "tk"))
def basic_conv_forward(x, weight, gamma, beta, *,
                       stride=1, padding=0, dilation=1, tm=None, tk=None):
    """Forward of BasicConv(..., relu=True, bn=True, bias=False, groups=1).

    x: [N, C, H, W] (NCHW), weight: [OC, C, KH, KW], gamma/beta: [OC].
    Returns [N, OC, OH, OW] (NCHW).
    """
    n, c, h, w = x.shape
    oc, _, kh, kw = weight.shape
    kdim = c * kh * kw

    # bf16 MXU operands; f32 accumulation happens inside the kernel.
    patches, oh, ow = _im2col(x.astype(jnp.bfloat16), kh, kw,
                              stride, padding, dilation)
    w2 = weight.astype(jnp.bfloat16).reshape(oc, kdim).T            # [K, OC]

    m = n * oh * ow
    oc_pad = _round_up(oc, LANE)          # lane-dense output channels
    k_pad = _round_up(kdim, LANE)         # MXU-friendly contraction length

    # ---- tile selection, sized for a conservative VMEM budget (v7x-safe) ----
    if tk is None:
        tk = 128
        for cand in (512, 384, 256, 128):
            if k_pad % cand == 0:
                tk = cand
                break
    assert k_pad % tk == 0
    if tm is None:
        budget = 24 * 1024 * 1024          # working set incl. double buffering
        tm = 128
        for cand in (1024, 512, 256, 128):
            need = (2 * (cand * tk * 2 + tk * oc_pad * 2)   # bf16 in x2 bufs
                    + cand * oc_pad * 4                      # f32 accumulator
                    + 2 * cand * oc_pad * 4                  # f32 y out x2 bufs
                    + 4 * 8 * oc_pad * 4)                    # sums outputs
            if need <= budget:
                tm = cand
                break
        tm = min(tm, _round_up(m, 128))
    m_pad = _round_up(m, tm)
    m_tiles = m_pad // tm
    k_tiles = k_pad // tk

    patches = jnp.pad(patches, ((0, m_pad - m), (0, k_pad - kdim)))
    w2 = jnp.pad(w2, ((0, k_pad - kdim), (0, oc_pad - oc)))

    vmem_limit = 48 * 1024 * 1024

    cost1 = pl.CostEstimate(
        flops=2 * m_pad * k_pad * oc_pad,
        transcendentals=0,
        bytes_accessed=(patches.size * 2 + w2.size * 2 * m_tiles
                        + m_pad * oc_pad * 4))

    # ---------------- Pass 1: GEMM + per-tile BN statistics ------------------
    y, s1, s2 = pl.pallas_call(
        _gemm_stats_kernel,
        out_shape=(
            jax.ShapeDtypeStruct((m_pad, oc_pad), jnp.float32),
            jax.ShapeDtypeStruct((m_tiles * 8, oc_pad), jnp.float32),
            jax.ShapeDtypeStruct((m_tiles * 8, oc_pad), jnp.float32),
        ),
        grid_spec=pltpu.PrefetchScalarGridSpec(
            num_scalar_prefetch=0,
            grid=(m_tiles, k_tiles),                    # reduction axis last
            in_specs=[
                pl.BlockSpec((tm, tk), lambda i, k: (i, k)),
                pl.BlockSpec((tk, oc_pad), lambda i, k: (k, 0)),
            ],
            out_specs=[
                pl.BlockSpec((tm, oc_pad), lambda i, k: (i, 0)),
                pl.BlockSpec((8, oc_pad), lambda i, k: (i, 0)),
                pl.BlockSpec((8, oc_pad), lambda i, k: (i, 0)),
            ],
            scratch_shapes=[pltpu.VMEM((tm, oc_pad), jnp.float32)],
        ),
        compiler_params=pltpu.CompilerParams(
            dimension_semantics=("parallel", "arbitrary"),
            vmem_limit_bytes=vmem_limit),
        cost_estimate=cost1,
    )(patches, w2)

    # ------- tiny per-channel BN statistics + affine folding (plain JAX) -----
    count = jnp.float32(m)                 # true row count; padded rows add 0
    sum_y = s1.reshape(m_tiles, 8, oc_pad)[:, 0, :].sum(axis=0)
    sum_sq = s2.reshape(m_tiles, 8, oc_pad)[:, 0, :].sum(axis=0)
    mean = sum_y / count
    var = jnp.maximum(sum_sq / count - mean * mean, 0.0)  # biased (train-mode BN)
    gamma_pad = jnp.zeros((oc_pad,), jnp.float32).at[:oc].set(
        gamma.astype(jnp.float32))
    beta_pad = jnp.zeros((oc_pad,), jnp.float32).at[:oc].set(
        beta.astype(jnp.float32))
    scale_vec = gamma_pad * jax.lax.rsqrt(var + BN_EPS)
    shift_vec = beta_pad - mean * scale_vec
    scale = scale_vec.reshape(1, oc_pad)
    shift = shift_vec.reshape(1, oc_pad)

    cost2 = pl.CostEstimate(
        flops=3 * m_pad * oc_pad,
        transcendentals=0,
        bytes_accessed=2 * m_pad * oc_pad * 4)

    # ---------------- Pass 2: normalize + ReLU (in place over y) -------------
    out = pl.pallas_call(
        _bn_relu_kernel,
        out_shape=jax.ShapeDtypeStruct((m_pad, oc_pad), jnp.float32),
        grid_spec=pltpu.PrefetchScalarGridSpec(
            num_scalar_prefetch=0,
            grid=(m_tiles,),
            in_specs=[
                pl.BlockSpec((tm, oc_pad), lambda i: (i, 0)),
                pl.BlockSpec((1, oc_pad), lambda i: (0, 0)),
                pl.BlockSpec((1, oc_pad), lambda i: (0, 0)),
            ],
            out_specs=pl.BlockSpec((tm, oc_pad), lambda i: (i, 0)),
        ),
        compiler_params=pltpu.CompilerParams(
            dimension_semantics=("parallel",),
            vmem_limit_bytes=vmem_limit),
        cost_estimate=cost2,
        input_output_aliases={0: 0},       # reuse the y buffer for the output
    )(y, scale, shift)

    # Slice padding away and restore PyTorch NCHW layout.
    # (Returning NHWC would skip this transpose if downstream allowed it.)
    out = out[:m, :oc].reshape(n, oh, ow, oc).transpose(0, 3, 1, 2)
    return out


def _reference(x, weight, gamma, beta, *, stride, padding, dilation):
    """Pure-JAX reference (conv + train-mode BN + ReLU) on bf16-rounded inputs,
    matching the kernel's bf16-operand / f32-accumulation MXU path."""
    xb = x.astype(jnp.bfloat16).astype(jnp.float32)
    wb = weight.astype(jnp.bfloat16).astype(jnp.float32)
    y = jax.lax.conv_general_dilated(
        xb, wb,
        window_strides=(stride, stride),
        padding=[(padding, padding), (padding, padding)],
        rhs_dilation=(dilation, dilation),
        dimension_numbers=("NCHW", "OIHW", "NCHW"),
        precision=jax.lax.Precision.HIGHEST)
    mean = jnp.mean(y, axis=(0, 2, 3), keepdims=True)
    var = jnp.mean((y - mean) ** 2, axis=(0, 2, 3), keepdims=True)
    y = (y - mean) * jax.lax.rsqrt(var + BN_EPS)
    y = y * gamma.reshape(1, -1, 1, 1) + beta.reshape(1, -1, 1, 1)
    return jnp.maximum(y, 0.0)


if __name__ == "__main__":
    # BasicConv(in_planes=16, out_planes=32, kernel_size=3, stride=1, padding=1)
    N, C, H, W = 2, 16, 16, 16
    OC, KH, KW = 32, 3, 3
    stride, padding, dilation = 1, 1, 1

    key = jax.random.PRNGKey(0)
    kx, kw_ = jax.random.split(key)
    x = jax.random.normal(kx, (N, C, H, W), dtype=jnp.float32)
    weight = 0.1 * jax.random.normal(kw_, (OC, C, KH, KW), dtype=jnp.float32)
    gamma = jnp.ones((OC,), dtype=jnp.float32)    # PyTorch BN affine init
    beta = jnp.zeros((OC,), dtype=jnp.float32)

    # tm=256 / tk=128 force a (2 M-tiles, 2 K-tiles) grid at this small size so
    # the tiled GEMM + per-tile BN-stat reduction path is exercised end to end.
    out = basic_conv_forward(x, weight, gamma, beta,
                             stride=stride, padding=padding, dilation=dilation,
                             tm=256, tk=128)
    out = jax.block_until_ready(out)

    ref = _reference(x, weight, gamma, beta,
                     stride=stride, padding=padding, dilation=dilation)
    assert out.shape == (N, OC, H, W), out.shape
    max_err = float(jnp.max(jnp.abs(out - ref)))
    assert jnp.allclose(out, ref, atol=5e-4, rtol=5e-4), max_err

    print("KERNEL_OK")
</pallas_src>

<mosaic_0001>
module attributes {stable_mosaic.version = 11 : i64} {
  func.func @_gemm_stats_kernel(%arg0: i32, %arg1: i32, %arg2: memref<256x128xbf16, #tpu.memory_space<vmem>>, %arg3: memref<128x128xbf16, #tpu.memory_space<vmem>>, %arg4: memref<256x128xf32, #tpu.memory_space<vmem>>, %arg5: memref<8x128xf32, #tpu.memory_space<vmem>>, %arg6: memref<8x128xf32, #tpu.memory_space<vmem>>, %arg7: memref<256x128xf32, #tpu.memory_space<vmem>>) attributes {dimension_semantics = [#tpu.dimension_semantics<parallel>, #tpu.dimension_semantics<arbitrary>], iteration_bounds = array<i64: 2, 2>, scalar_prefetch = 0 : i64, scratch_operands = 1 : i64, tpu.core_type = #tpu.core_type<tc>, window_params = [{transform_indices = @transform_0, window_bounds = array<i64: 256, 128>}, {transform_indices = @transform_1, window_bounds = array<i64: 128, 128>}, {transform_indices = @transform_2, window_bounds = array<i64: 256, 128>}, {transform_indices = @transform_3, window_bounds = array<i64: 8, 128>}, {transform_indices = @transform_4, window_bounds = array<i64: 8, 128>}]} {
    %c0_i32 = arith.constant 0 : i32
    %0 = arith.cmpi eq, %arg1, %c0_i32 : i32
    %1 = arith.extui %0 : i1 to i32
    %c0_i32_0 = arith.constant 0 : i32
    %2 = arith.cmpi ne, %1, %c0_i32_0 : i32
    scf.if %2 {
      %cst_9 = arith.constant 0.000000e+00 : f32
      %12 = vector.broadcast %cst_9 : f32 to vector<256x128xf32>
      %c0_10 = arith.constant 0 : index
      %c0_11 = arith.constant 0 : index
      %13 = vector.load %arg7[%c0_10, %c0_11] : memref<256x128xf32, #tpu.memory_space<vmem>>, vector<256x128xf32>
      tpu.vector_store %arg7[%c0_10, %c0_11], %12 {strides = array<i32>} : memref<256x128xf32, #tpu.memory_space<vmem>>, vector<256x128xf32>,
    } else {
    }
    %c0 = arith.constant 0 : index
    %c0_1 = arith.constant 0 : index
    %3 = vector.load %arg7[%c0, %c0_1] : memref<256x128xf32, #tpu.memory_space<vmem>>, vector<256x128xf32>
    %c0_2 = arith.constant 0 : index
    %c0_3 = arith.constant 0 : index
    %4 = vector.load %arg2[%c0_2, %c0_3] : memref<256x128xbf16, #tpu.memory_space<vmem>>, vector<256x128xbf16>
    %c0_4 = arith.constant 0 : index
    %c0_5 = arith.constant 0 : index
    %5 = vector.load %arg3[%c0_4, %c0_5] : memref<128x128xbf16, #tpu.memory_space<vmem>>, vector<128x128xbf16>
    %cst = arith.constant dense<0.000000e+00> : vector<256x128xf32>
    %6 = tpu.matmul %4, %5, %cst {dimension_numbers = #tpu.dot_dimension_numbers<[1], [0], [0], [1], [0, 0, 1, 1], [], []>} : vector<256x128xbf16>, vector<128x128xbf16>, vector<256x128xf32> -> vector<256x128xf32>
    %7 = arith.addf %3, %6 : vector<256x128xf32>
    %c0_6 = arith.constant 0 : index
    %c0_7 = arith.constant 0 : index
    %8 = vector.load %arg7[%c0_6, %c0_7] : memref<256x128xf32, #tpu.memory_space<vmem>>, vector<256x128xf32>
    tpu.vector_store %arg7[%c0_6, %c0_7], %7 {strides = array<i32>} : memref<256x128xf32, #tpu.memory_space<vmem>>, vector<256x128xf32>,
    %c1_i32 = arith.constant 1 : i32
    %9 = arith.cmpi eq, %arg1, %c1_i32 : i32
    %10 = arith.extui %9 : i1 to i32
    %c0_i32_8 = arith.constant 0 : i32
    %11 = arith.cmpi ne, %10, %c0_i32_8 : i32
    scf.if %11 {
      %c0_9 = arith.constant 0 : index
      %c0_10 = arith.constant 0 : index
      %12 = vector.load %arg7[%c0_9, %c0_10] : memref<256x128xf32, #tpu.memory_space<vmem>>, vector<256x128xf32>
      %c0_11 = arith.constant 0 : index
      %c0_12 = arith.constant 0 : index
      %13 = vector.load %arg4[%c0_11, %c0_12] : memref<256x128xf32, #tpu.memory_space<vmem>>, vector<256x128xf32>
      tpu.vector_store %arg4[%c0_11, %c0_12], %12 {strides = array<i32>} : memref<256x128xf32, #tpu.memory_space<vmem>>, vector<256x128xf32>,
      %cst_13 = arith.constant dense<0.000000e+00> : vector<128xf32>
      %14 = vector.multi_reduction <add>, %12, %cst_13 [0] : vector<256x128xf32> to vector<128xf32>
      %15 = vector.shape_cast %14 : vector<128xf32> to vector<1x128xf32>
      %16 = arith.mulf %12, %12 : vector<256x128xf32>
      %cst_14 = arith.constant dense<0.000000e+00> : vector<128xf32>
      %17 = vector.multi_reduction <add>, %16, %cst_14 [0] : vector<256x128xf32> to vector<128xf32>
      %18 = vector.shape_cast %17 : vector<128xf32> to vector<1x128xf32>
      %19 = vector.shape_cast %15 : vector<1x128xf32> to vector<1x128xf32>
      %20 = vector.broadcast %19 : vector<1x128xf32> to vector<8x128xf32>
      %c0_15 = arith.constant 0 : index
      %c0_16 = arith.constant 0 : index
      %21 = vector.load %arg5[%c0_15, %c0_16] : memref<8x128xf32, #tpu.memory_space<vmem>>, vector<8x128xf32>
      tpu.vector_store %arg5[%c0_15, %c0_16], %20 {strides = array<i32>} : memref<8x128xf32, #tpu.memory_space<vmem>>, vector<8x128xf32>,
      %22 = vector.shape_cast %18 : vector<1x128xf32> to vector<1x128xf32>
      %23 = vector.broadcast %22 : vector<1x128xf32> to vector<8x128xf32>
      %c0_17 = arith.constant 0 : index
      %c0_18 = arith.constant 0 : index
      %24 = vector.load %arg6[%c0_17, %c0_18] : memref<8x128xf32, #tpu.memory_space<vmem>>, vector<8x128xf32>
      tpu.vector_store %arg6[%c0_17, %c0_18], %23 {strides = array<i32>} : memref<8x128xf32, #tpu.memory_space<vmem>>, vector<8x128xf32>,
    } else {
    }
    return
  }
  func.func @transform_0(%arg0: i32, %arg1: i32) -> (i32, i32) {
    %c0_i32 = arith.constant 0 : i32
    return %arg0, %arg1 : i32, i32
  }
  func.func @transform_1(%arg0: i32, %arg1: i32) -> (i32, i32) {
    %c0_i32 = arith.constant 0 : i32
    %c0_i32_0 = arith.constant 0 : i32
    return %arg1, %c0_i32 : i32, i32
  }
  func.func @transform_2(%arg0: i32, %arg1: i32) -> (i32, i32) {
    %c0_i32 = arith.constant 0 : i32
    %c0_i32_0 = arith.constant 0 : i32
    return %arg0, %c0_i32 : i32, i32
  }
  func.func @transform_3(%arg0: i32, %arg1: i32) -> (i32, i32) {
    %c0_i32 = arith.constant 0 : i32
    %c0_i32_0 = arith.constant 0 : i32
    return %arg0, %c0_i32 : i32, i32
  }
  func.func @transform_4(%arg0: i32, %arg1: i32) -> (i32, i32) {
    %c0_i32 = arith.constant 0 : i32
    %c0_i32_0 = arith.constant 0 : i32
    return %arg0, %c0_i32 : i32, i32
  }
}

module attributes {stable_mosaic.version = 11 : i64} {
  func.func @_bn_relu_kernel(%arg0: i32, %arg1: memref<256x128xf32, #tpu.memory_space<vmem>>, %arg2: memref<1x128xf32, #tpu.memory_space<vmem>>, %arg3: memref<1x128xf32, #tpu.memory_space<vmem>>, %arg4: memref<256x128xf32, #tpu.memory_space<vmem>>) attributes {dimension_semantics = [#tpu.dimension_semantics<parallel>], iteration_bounds = array<i64: 2>, scalar_prefetch = 0 : i64, scratch_operands = 0 : i64, tpu.core_type = #tpu.core_type<tc>, window_params = [{transform_indices = @transform_0, window_bounds = array<i64: 256, 128>}, {pipeline_mode = #tpu.pipeline_mode<synchronous>, transform_indices = @transform_1, window_bounds = array<i64: 1, 128>}, {pipeline_mode = #tpu.pipeline_mode<synchronous>, transform_indices = @transform_2, window_bounds = array<i64: 1, 128>}, {transform_indices = @transform_3, window_bounds = array<i64: 256, 128>}]} {
    %c0 = arith.constant 0 : index
    %c0_0 = arith.constant 0 : index
    %0 = vector.load %arg1[%c0, %c0_0] : memref<256x128xf32, #tpu.memory_space<vmem>>, vector<256x128xf32>
    %c0_1 = arith.constant 0 : index
    %c0_2 = arith.constant 0 : index
    %1 = vector.load %arg2[%c0_1, %c0_2] : memref<1x128xf32, #tpu.memory_space<vmem>>, vector<1x128xf32>
    %2 = vector.broadcast %1 : vector<1x128xf32> to vector<256x128xf32>
    %3 = arith.mulf %0, %2 : vector<256x128xf32>
    %c0_3 = arith.constant 0 : index
    %c0_4 = arith.constant 0 : index
    %4 = vector.load %arg3[%c0_3, %c0_4] : memref<1x128xf32, #tpu.memory_space<vmem>>, vector<1x128xf32>
    %5 = vector.broadcast %4 : vector<1x128xf32> to vector<256x128xf32>
    %6 = arith.addf %3, %5 : vector<256x128xf32>
    %cst = arith.constant 0.000000e+00 : f32
    %7 = vector.broadcast %cst : f32 to vector<256x128xf32>
    %8 = arith.maximumf %6, %7 : vector<256x128xf32>
    %c0_5 = arith.constant 0 : index
    %c0_6 = arith.constant 0 : index
    %9 = vector.load %arg4[%c0_5, %c0_6] : memref<256x128xf32, #tpu.memory_space<vmem>>, vector<256x128xf32>
    tpu.vector_store %arg4[%c0_5, %c0_6], %8 {strides = array<i32>} : memref<256x128xf32, #tpu.memory_space<vmem>>, vector<256x128xf32>,
    return
  }
  func.func @transform_0(%arg0: i32) -> (i32, i32) {
    %c0_i32 = arith.constant 0 : i32
    %c0_i32_0 = arith.constant 0 : i32
    return %arg0, %c0_i32 : i32, i32
  }
  func.func @transform_1(%arg0: i32) -> (i32, i32) {
    %c0_i32 = arith.constant 0 : i32
    %c0_i32_0 = arith.constant 0 : i32
    %c0_i32_1 = arith.constant 0 : i32
    return %c0_i32, %c0_i32_0 : i32, i32
  }
  func.func @transform_2(%arg0: i32) -> (i32, i32) {
    %c0_i32 = arith.constant 0 : i32
    %c0_i32_0 = arith.constant 0 : i32
    %c0_i32_1 = arith.constant 0 : i32
    return %c0_i32, %c0_i32_0 : i32, i32
  }
  func.func @transform_3(%arg0: i32) -> (i32, i32) {
    %c0_i32 = arith.constant 0 : i32
    %c0_i32_0 = arith.constant 0 : i32
    return %arg0, %c0_i32 : i32, i32
  }
}

</mosaic_0001>

<llo_original>
// kernel: basic_conv_forward.3
$region0: #{basic_conv_forward.3}
  #allocation0 [shape = 'u32[]', space=smem, size = 0x4, offset = 0x4, fixed_abs, tag = 'smem constant byte address 0x4 - core index']
  #allocation1 [shape = 'u32[72,128]{1,0:T(1,128)}', space=vmem, size = 0x9000, scoped, tag = 'internal scratch']
  %s0 = inlined_call_operand.vmem [shape: f32[512,128], index: 0, kind: input, shape index: {}, may-alias: {0,3}]
  %s1 = inlined_call_operand.vmem [shape: f32[1,128], index: 1, kind: input, shape index: {}]
  %s2 = inlined_call_operand.vmem [shape: f32[1,128], index: 2, kind: input, shape index: {}]
  %s3 = inlined_call_operand.vmem [shape: f32[512,128], index: 3, kind: output, shape index: {}, may-alias: {0,3}]
  %s4 = sld [smem:[#allocation0]]
  $region45: #{basic_conv_forward.3} parent=0
    _
  %s6 = ssub.s32 1, %s4
  %s7 = scalar_select 0, %s6, %s4
  loop: start=0, step=1, limit=4
  $region2: #{basic_conv_forward.3} parent=0 // loop_pre_header
    _
  $region3: #{basic_conv_forward.3} parent=0 // loop_header
    %s9 = sphi 0, %s13
    %p10 = scmp.ge.s32.totalorder %s9, 4
    %s19 = sphi 0, %s21
    %s22 = sphi 0, %s19
    %s23 = sphi 0, %s22
    %s39 = sphi 0, %s23
    %s43 = sphi 0, %s43
    %s45 = sphi 0, %s43
    %s46 = sphi 0, %s45
    %s60 = sphi 0, %s46
    %s64 = sphi 0, %s64
    %s66 = sphi 0, %s64
    %s67 = sphi 0, %s66
    %s81 = sphi 0, %s67
    %s87 = sphi 0, %s89
    %s90 = sphi 0, %s87
    %s91 = sphi 0, %s90
    %s107 = sphi 0, %s91
  $region4: #{basic_conv_forward.3} parent=0 // loop_header_branch
    %12 = sbr.rel (%p10) target = $region8
  $region5: #{basic_conv_forward.3} parent=0 // loop_body
    %s14 = ssub.s32 %s9, 1
    %s15 = ssub.s32 %s9, 2
    %s16 = sadd.s32 %s9, 1
    %s17 = ssub.s32 %s9, %s16
    %p18 = scmp.eq.s32.totalorder %s17, 0
    %s20 = sadd.s32 %s19, 1
    %s21 = scalar_select %p18, %s19, %s20
    %p24 = pneg %p18
    %p25 = scmp.eq.s32.totalorder %s9, 1
    %p26 = por %p24, %p25
    %p27 = scmp.ne.s32.totalorder %s19, %s22
    %p28 = scmp.eq.s32.totalorder %s9, 0
    %p29 = por %p27, %p28
    %p30 = scmp.ne.s32.totalorder %s19, %s22
    %p31 = scmp.eq.s32.totalorder %s14, 1
    %p32 = por %p30, %p31
    %p33 = scmp.ne.s32.totalorder %s22, %s23
    %p34 = scmp.eq.s32.totalorder %s14, 0
    %p35 = por %p33, %p34
    %p36 = scmp.ne.s32.totalorder %s22, %s23
    %p37 = scmp.eq.s32.totalorder %s15, 1
    %p38 = por %p36, %p37
    %p40 = scmp.ne.s32.totalorder %s23, %s39
    %p41 = scmp.eq.s32.totalorder %s15, 0
    %p42 = por %p40, %p41
    %s44 = sadd.s32 %s43, 1
    %p47 = scmp.eq.s32.totalorder %s9, 1
    %p48 = scmp.ne.s32.totalorder %s43, %s45
    %p49 = scmp.eq.s32.totalorder %s9, 0
    %p50 = por %p48, %p49
    %p51 = scmp.ne.s32.totalorder %s43, %s45
    %p52 = scmp.eq.s32.totalorder %s14, 1
    %p53 = por %p51, %p52
    %p54 = scmp.ne.s32.totalorder %s45, %s46
    %p55 = scmp.eq.s32.totalorder %s14, 0
    %p56 = por %p54, %p55
    %p57 = scmp.ne.s32.totalorder %s45, %s46
    %p58 = scmp.eq.s32.totalorder %s15, 1
    %p59 = por %p57, %p58
    %p61 = scmp.ne.s32.totalorder %s46, %s60
    %p62 = scmp.eq.s32.totalorder %s15, 0
    %p63 = por %p61, %p62
    %s65 = sadd.s32 %s64, 1
    %p68 = scmp.eq.s32.totalorder %s9, 1
    %p69 = scmp.ne.s32.totalorder %s64, %s66
    %p70 = scmp.eq.s32.totalorder %s9, 0
    %p71 = por %p69, %p70
    %p72 = scmp.ne.s32.totalorder %s64, %s66
    %p73 = scmp.eq.s32.totalorder %s14, 1
    %p74 = por %p72, %p73
    %p75 = scmp.ne.s32.totalorder %s66, %s67
    %p76 = scmp.eq.s32.totalorder %s14, 0
    %p77 = por %p75, %p76
    %p78 = scmp.ne.s32.totalorder %s66, %s67
    %p79 = scmp.eq.s32.totalorder %s15, 1
    %p80 = por %p78, %p79
    %p82 = scmp.ne.s32.totalorder %s67, %s81
    %p83 = scmp.eq.s32.totalorder %s15, 0
    %p84 = por %p82, %p83
    %s85 = ssub.s32 %s9, %s16
    %p86 = scmp.eq.s32.totalorder %s85, 0
    %s88 = sadd.s32 %s87, 1
    %s89 = scalar_select %p86, %s87, %s88
    %p92 = pneg %p86
    %p93 = scmp.eq.s32.totalorder %s9, 1
    %p94 = por %p92, %p93
    %p95 = scmp.ne.s32.totalorder %s87, %s90
    %p96 = scmp.eq.s32.totalorder %s9, 0
    %p97 = por %p95, %p96
    %p98 = scmp.ne.s32.totalorder %s87, %s90
    %p99 = scmp.eq.s32.totalorder %s14, 1
    %p100 = por %p98, %p99
    %p101 = scmp.ne.s32.totalorder %s90, %s91
    %p102 = scmp.eq.s32.totalorder %s14, 0
    %p103 = por %p101, %p102
    %p104 = scmp.ne.s32.totalorder %s90, %s91
    %p105 = scmp.eq.s32.totalorder %s15, 1
    %p106 = por %p104, %p105
    %p108 = scmp.ne.s32.totalorder %s91, %s107
    %p109 = scmp.eq.s32.totalorder %s15, 0
    %p110 = por %p108, %p109
    %p111 = scmp.le.s32.totalorder 1, %s9
    %p112 = scmp.lt.s32.totalorder %s9, 3
    %p113 = pnand %p111, %p112
    %p114 = pneg %p113
    // Predicated region
    $region9: #{basic_conv_forward.3} parent=5 // pred_check
      _
    $region10: #{basic_conv_forward.3} parent=5 // pred_check_branch
      %116 = sbr.rel (%p113) target = $region12
    $region11: #{basic_conv_forward.3} parent=5 // pred_region
      %s117 = ssub.s32 %s9, 1
      // Predicated region
      $region13: #{basic_conv_forward.3} parent=11 // pred_check
        %p118 = pneg %p56
      $region14: #{basic_conv_forward.3} parent=11 // pred_check_branch
        %120 = sbr.rel (%p118) target = $region16
      $region15: #{basic_conv_forward.3} parent=11 // pred_region
        _
      $region16: #{basic_conv_forward.3} parent=11 // pred_fallthru
        _
      // Predicated region
      $region17: #{basic_conv_forward.3} parent=11 // pred_check
        %p121 = pneg %p77
      $region18: #{basic_conv_forward.3} parent=11 // pred_check_branch
        %123 = sbr.rel (%p121) target = $region20
      $region19: #{basic_conv_forward.3} parent=11 // pred_region
        _
      $region20: #{basic_conv_forward.3} parent=11 // pred_fallthru
        _
    $region12: #{basic_conv_forward.3} parent=5 // pred_fallthru
      _
    %p124 = scmp.lt.s32.totalorder %s9, 2
    // Predicated region
    $region21: #{basic_conv_forward.3} parent=5 // pred_check
      %p125 = pneg %p124
    $region22: #{basic_conv_forward.3} parent=5 // pred_check_branch
      %127 = sbr.rel (%p125) target = $region24
    $region23: #{basic_conv_forward.3} parent=5 // pred_region
      // Predicated region
      $region25: #{basic_conv_forward.3} parent=23 // pred_check
        %p128 = pneg %p29
      $region26: #{basic_conv_forward.3} parent=23 // pred_check_branch
        %130 = sbr.rel (%p128) target = $region28
      $region27: #{basic_conv_forward.3} parent=23 // pred_region
        %s131 = smul.u32 32, %s9
        %p132 = scmp.lt.s32.totalorder %s131, 63
        %s133 = scalar_select %p132, %s131, 63
        %s134 = smul.addr %s133, 8
        %s135 = scalar_lea.vmem %s0, %s134
        %s136 = smul.u32 32, %s9
      $region28: #{basic_conv_forward.3} parent=23 // pred_fallthru
        _
    $region24: #{basic_conv_forward.3} parent=5 // pred_fallthru
      _
    %p137 = scmp.le.s32.totalorder 1, %s9
    %p138 = scmp.lt.s32.totalorder %s9, 3
    %p139 = pnand %p137, %p138
    %p140 = pneg %p139
    // Predicated region
    $region29: #{basic_conv_forward.3} parent=5 // pred_check
      _
    $region30: #{basic_conv_forward.3} parent=5 // pred_check_branch
      %142 = sbr.rel (%p139) target = $region32
    $region31: #{basic_conv_forward.3} parent=5 // pred_region
      %s143 = ssub.s32 %s9, 1
      %s144 = smul.u32 32, %s14
      %p145 = scmp.lt.s32.totalorder %s144, 63
      %s146 = scalar_select %p145, %s144, 63
      %s147 = smul.addr %s146, 8
      %s148 = scalar_lea.vmem %s0, %s147
      %p149 = pneg %p35
      %p150 = pneg %p32
      %p151 = pneg %p56
      %p152 = pneg %p53
      %p153 = pneg %p77
      %p154 = pneg %p74
      %p155 = pneg %p103
      %p156 = pneg %p100
      %s157 = smul.u32 32, %s14
      %p158 = scmp.lt.s32.totalorder %s157, 63
      %s159 = scalar_select %p158, %s157, 63
      %s160 = smul.addr %s159, 8
      %s161 = scalar_lea.vmem %s3, %s160
      %s162 = smul.u32 32, %s14
      %p163 = scmp.lt.s32.totalorder %s162, 63
      %s164 = scalar_select %p163, %s162, 63
      %s165 = smul.addr %s164, 8
      %s166 = scalar_lea.vmem %s0, %s165
      %s167 = smul.u32 32, %s14
      %s168 = smul.u32 32, %s14
      %p169 = scmp.lt.s32.totalorder %s168, 63
      %s170 = scalar_select %p169, %s168, 63
      %s171 = smul.addr %s170, 8
      %s172 = scalar_lea.vmem %s3, %s171
      %s173 = smul.u32 32, %s14
      %v174 = vld [vmem:[%s166] sm:$0xff]
      %v175 = vld [vmem:[%s166 + $0x8] sm:$0xff]
      %v176 = vld [vmem:[%s166 + $0x10] sm:$0xff]
      %v177 = vld [vmem:[%s166 + $0x18] sm:$0xff]
      %v178 = vld [vmem:[%s166 + $0x20] sm:$0xff]
      %v179 = vld [vmem:[%s166 + $0x28] sm:$0xff]
      %v180 = vld [vmem:[%s166 + $0x30] sm:$0xff]
      %v181 = vld [vmem:[%s166 + $0x38] sm:$0xff]
      %v182 = vld [vmem:[%s166 + $0x40] sm:$0xff]
      %v183 = vld [vmem:[%s166 + $0x48] sm:$0xff]
      %v184 = vld [vmem:[%s166 + $0x50] sm:$0xff]
      %v185 = vld [vmem:[%s166 + $0x58] sm:$0xff]
      %v186 = vld [vmem:[%s166 + $0x60] sm:$0xff]
      %v187 = vld [vmem:[%s166 + $0x68] sm:$0xff]
      %v188 = vld [vmem:[%s166 + $0x70] sm:$0xff]
      %v189 = vld [vmem:[%s166 + $0x78] sm:$0xff]
      %v190 = vld [vmem:[%s166 + $0x80] sm:$0xff]
      %v191 = vld [vmem:[%s166 + $0x88] sm:$0xff]
      %v192 = vld [vmem:[%s166 + $0x90] sm:$0xff]
      %v193 = vld [vmem:[%s166 + $0x98] sm:$0xff]
      %v194 = vld [vmem:[%s166 + $0xa0] sm:$0xff]
      %v195 = vld [vmem:[%s166 + $0xa8] sm:$0xff]
      %v196 = vld [vmem:[%s166 + $0xb0] sm:$0xff]
      %v197 = vld [vmem:[%s166 + $0xb8] sm:$0xff]
      %v198 = vld [vmem:[%s166 + $0xc0] sm:$0xff]
      %v199 = vld [vmem:[%s166 + $0xc8] sm:$0xff]
      %v200 = vld [vmem:[%s166 + $0xd0] sm:$0xff]
      %v201 = vld [vmem:[%s166 + $0xd8] sm:$0xff]
      %v202 = vld [vmem:[%s166 + $0xe0] sm:$0xff]
      %v203 = vld [vmem:[%s166 + $0xe8] sm:$0xff]
      %v204 = vld [vmem:[%s166 + $0xf0] sm:$0xff]
      %v205 = vld [vmem:[%s166 + $0xf8] sm:$0xff]
      %v206 = vld [vmem:[%s1] sm:$0x1]
      %v208 = vperm.slane %v206, 0
      %v210 = vmul.f32 %v174, %v208
      %v211 = vmul.f32 %v175, %v208
      %v212 = vmul.f32 %v176, %v208
      %v213 = vmul.f32 %v177, %v208
      %v214 = vmul.f32 %v178, %v208
      %v215 = vmul.f32 %v179, %v208
      %v216 = vmul.f32 %v180, %v208
      %v217 = vmul.f32 %v181, %v208
      %v218 = vmul.f32 %v182, %v208
      %v219 = vmul.f32 %v183, %v208
      %v220 = vmul.f32 %v184, %v208
      %v221 = vmul.f32 %v185, %v208
      %v222 = vmul.f32 %v186, %v208
      %v223 = vmul.f32 %v187, %v208
      %v224 = vmul.f32 %v188, %v208
      %v225 = vmul.f32 %v189, %v208
      %v226 = vmul.f32 %v190, %v208
      %v227 = vmul.f32 %v191, %v208
      %v228 = vmul.f32 %v192, %v208
      %v229 = vmul.f32 %v193, %v208
      %v230 = vmul.f32 %v194, %v208
      %v231 = vmul.f32 %v195, %v208
      %v232 = vmul.f32 %v196, %v208
      %v233 = vmul.f32 %v197, %v208
      %v234 = vmul.f32 %v198, %v208
      %v235 = vmul.f32 %v199, %v208
      %v236 = vmul.f32 %v200, %v208
      %v237 = vmul.f32 %v201, %v208
      %v238 = vmul.f32 %v202, %v208
      %v239 = vmul.f32 %v203, %v208
      %v240 = vmul.f32 %v204, %v208
      %v241 = vmul.f32 %v205, %v208
      %v242 = vld [vmem:[%s2] sm:$0x1]
      %v244 = vperm.slane %v242, 0
      %v246 = vadd.f32 %v210, %v244
      %v247 = vadd.f32 %v211, %v244
      %v248 = vadd.f32 %v212, %v244
      %v249 = vadd.f32 %v213, %v244
      %v250 = vadd.f32 %v214, %v244
      %v251 = vadd.f32 %v215, %v244
      %v252 = vadd.f32 %v216, %v244
      %v253 = vadd.f32 %v217, %v244
      %v254 = vadd.f32 %v218, %v244
      %v255 = vadd.f32 %v219, %v244
      %v256 = vadd.f32 %v220, %v244
      %v257 = vadd.f32 %v221, %v244
      %v258 = vadd.f32 %v222, %v244
      %v259 = vadd.f32 %v223, %v244
      %v260 = vadd.f32 %v224, %v244
      %v261 = vadd.f32 %v225, %v244
      %v262 = vadd.f32 %v226, %v244
      %v263 = vadd.f32 %v227, %v244
      %v264 = vadd.f32 %v228, %v244
      %v265 = vadd.f32 %v229, %v244
      %v266 = vadd.f32 %v230, %v244
      %v267 = vadd.f32 %v231, %v244
      %v268 = vadd.f32 %v232, %v244
      %v269 = vadd.f32 %v233, %v244
      %v270 = vadd.f32 %v234, %v244
      %v271 = vadd.f32 %v235, %v244
      %v272 = vadd.f32 %v236, %v244
      %v273 = vadd.f32 %v237, %v244
      %v274 = vadd.f32 %v238, %v244
      %v275 = vadd.f32 %v239, %v244
      %v276 = vadd.f32 %v240, %v244
      %v277 = vadd.f32 %v241, %v244
      %v278 = vmax.f32 %v246, 0.0
      %v279 = vmax.f32 %v247, 0.0
      %v280 = vmax.f32 %v248, 0.0
      %v281 = vmax.f32 %v249, 0.0
      %v282 = vmax.f32 %v250, 0.0
      %v283 = vmax.f32 %v251, 0.0
      %v284 = vmax.f32 %v252, 0.0
      %v285 = vmax.f32 %v253, 0.0
      %v286 = vmax.f32 %v254, 0.0
      %v287 = vmax.f32 %v255, 0.0
      %v288 = vmax.f32 %v256, 0.0
      %v289 = vmax.f32 %v257, 0.0
      %v290 = vmax.f32 %v258, 0.0
      %v291 = vmax.f32 %v259, 0.0
      %v292 = vmax.f32 %v260, 0.0
      %v293 = vmax.f32 %v261, 0.0
      %v294 = vmax.f32 %v262, 0.0
      %v295 = vmax.f32 %v263, 0.0
      %v296 = vmax.f32 %v264, 0.0
      %v297 = vmax.f32 %v265, 0.0
      %v298 = vmax.f32 %v266, 0.0
      %v299 = vmax.f32 %v267, 0.0
      %v300 = vmax.f32 %v268, 0.0
      %v301 = vmax.f32 %v269, 0.0
      %v302 = vmax.f32 %v270, 0.0
      %v303 = vmax.f32 %v271, 0.0
      %v304 = vmax.f32 %v272, 0.0
      %v305 = vmax.f32 %v273, 0.0
      %v306 = vmax.f32 %v274, 0.0
      %v307 = vmax.f32 %v275, 0.0
      %v308 = vmax.f32 %v276, 0.0
      %v309 = vmax.f32 %v277, 0.0
      %310 = vst [vmem:[%s172] sm:$0xff] %v278
      %311 = vst [vmem:[%s172 + $0x8] sm:$0xff] %v279
      %312 = vst [vmem:[%s172 + $0x10] sm:$0xff] %v280
      %313 = vst [vmem:[%s172 + $0x18] sm:$0xff] %v281
      %314 = vst [vmem:[%s172 + $0x20] sm:$0xff] %v282
      %315 = vst [vmem:[%s172 + $0x28] sm:$0xff] %v283
      %316 = vst [vmem:[%s172 + $0x30] sm:$0xff] %v284
      %317 = vst [vmem:[%s172 + $0x38] sm:$0xff] %v285
      %318 = vst [vmem:[%s172 + $0x40] sm:$0xff] %v286
      %319 = vst [vmem:[%s172 + $0x48] sm:$0xff] %v287
      %320 = vst [vmem:[%s172 + $0x50] sm:$0xff] %v288
      %321 = vst [vmem:[%s172 + $0x58] sm:$0xff] %v289
      %322 = vst [vmem:[%s172 + $0x60] sm:$0xff] %v290
      %323 = vst [vmem:[%s172 + $0x68] sm:$0xff] %v291
      %324 = vst [vmem:[%s172 + $0x70] sm:$0xff] %v292
      %325 = vst [vmem:[%s172 + $0x78] sm:$0xff] %v293
      %326 = vst [vmem:[%s172 + $0x80] sm:$0xff] %v294
      %327 = vst [vmem:[%s172 + $0x88] sm:$0xff] %v295
      %328 = vst [vmem:[%s172 + $0x90] sm:$0xff] %v296
      %329 = vst [vmem:[%s172 + $0x98] sm:$0xff] %v297
      %330 = vst [vmem:[%s172 + $0xa0] sm:$0xff] %v298
      %331 = vst [vmem:[%s172 + $0xa8] sm:$0xff] %v299
      %332 = vst [vmem:[%s172 + $0xb0] sm:$0xff] %v300
      %333 = vst [vmem:[%s172 + $0xb8] sm:$0xff] %v301
      %334 = vst [vmem:[%s172 + $0xc0] sm:$0xff] %v302
      %335 = vst [vmem:[%s172 + $0xc8] sm:$0xff] %v303
      %336 = vst [vmem:[%s172 + $0xd0] sm:$0xff] %v304
      %337 = vst [vmem:[%s172 + $0xd8] sm:$0xff] %v305
      %338 = vst [vmem:[%s172 + $0xe0] sm:$0xff] %v306
      %339 = vst [vmem:[%s172 + $0xe8] sm:$0xff] %v307
      %340 = vst [vmem:[%s172 + $0xf0] sm:$0xff] %v308
      %341 = vst [vmem:[%s172 + $0xf8] sm:$0xff] %v309
      %s342 = smul.u32 32, %s14
      %p343 = scmp.lt.s32.totalorder %s342, 63
      %s344 = scalar_select %p343, %s342, 63
      %s345 = smul.addr %s344, 8
      %s346 = scalar_lea.vmem %s3, %s345
      // Predicated region
      $region33: #{basic_conv_forward.3} parent=31 // pred_check
        %p347 = pneg %p100
      $region34: #{basic_conv_forward.3} parent=31 // pred_check_branch
        %349 = sbr.rel (%p347) target = $region36
      $region35: #{basic_conv_forward.3} parent=31 // pred_region
        %s350 = smul.u32 32, %s14
      $region36: #{basic_conv_forward.3} parent=31 // pred_fallthru
        _
    $region32: #{basic_conv_forward.3} parent=5 // pred_fallthru
      _
    %p351 = scmp.le.s32.totalorder 2, %s9
    // Predicated region
    $region37: #{basic_conv_forward.3} parent=5 // pred_check
      %p352 = pneg %p351
    $region38: #{basic_conv_forward.3} parent=5 // pred_check_branch
      %354 = sbr.rel (%p352) target = $region40
    $region39: #{basic_conv_forward.3} parent=5 // pred_region
      %s355 = ssub.s32 %s9, 2
      // Predicated region
      $region41: #{basic_conv_forward.3} parent=39 // pred_check
        %p356 = pneg %p106
      $region42: #{basic_conv_forward.3} parent=39 // pred_check_branch
        %358 = sbr.rel (%p356) target = $region44
      $region43: #{basic_conv_forward.3} parent=39 // pred_region
        %s359 = smul.u32 32, %s15
        %p360 = scmp.lt.s32.totalorder %s359, 63
        %s361 = scalar_select %p360, %s359, 63
        %s362 = smul.addr %s361, 8
        %s363 = scalar_lea.vmem %s3, %s362
      $region44: #{basic_conv_forward.3} parent=39 // pred_fallthru
        _
    $region40: #{basic_conv_forward.3} parent=5 // pred_fallthru
      _
  $region6: #{basic_conv_forward.3} parent=0 // loop_footer
    %s13 = sadd.s32 1, %s9
  $region7: #{basic_conv_forward.3} parent=0 // loop_footer_branch
    %8 = sbr.rel target = $region3
  $region8: #{basic_conv_forward.3} parent=0 // loop_exit
    _

// kernel: basic_conv_forward.2
$region0: #{basic_conv_forward.2}
  #allocation0 [shape = 'u32[]', space=smem, size = 0x4, offset = 0x4, fixed_abs, tag = 'smem constant byte address 0x4 - core index']
  #allocation1 [shape = 'u32[72,128]{1,0:T(1,128)}', space=vmem, size = 0x9000, scoped, tag = 'internal scratch']
  #allocation2 [shape = 'f32[256,128]{1,0:T(8,128)}', space=vmem, size = 0x20000, scoped, tag = 'scratch operand']
  %s0 = inlined_call_operand.vmem [shape: bf16[512,256], index: 0, kind: input, shape index: {}]
  %s1 = inlined_call_operand.vmem [shape: bf16[256,128], index: 1, kind: input, shape index: {}]
  %s2 = inlined_call_operand.vmem [shape: f32[512,128], index: 2, kind: output, shape index: {0}]
  %s3 = inlined_call_operand.vmem [shape: f32[16,128], index: 3, kind: output, shape index: {1}]
  %s4 = inlined_call_operand.vmem [shape: f32[16,128], index: 4, kind: output, shape index: {2}]
  %5 = xla_tuple %s2, %s3, %s4
  %s6 = sld [smem:[#allocation0]]
  $region106: #{basic_conv_forward.2} parent=0
    _
  %s8 = ssub.s32 1, %s6
  %s9 = scalar_select 0, %s8, %s6
  $region1: #{basic_conv_forward.2} parent=0
    #allocation3 [shape = 'u8[131072]{0}', space=vmem, size = 0x20000, scoped, tag = 'input window, operand 0']
    loop: start=0, step=1, limit=6
    $region2: #{basic_conv_forward.2} parent=1 // loop_pre_header
      _
    $region3: #{basic_conv_forward.2} parent=1 // loop_header
      %s11 = sphi 0, %s15
      %p12 = scmp.ge.s32.totalorder %s11, 6
      %s18 = sphi 0, %s30
      %s19 = sphi 0, %s26
      %s20 = sphi 0, %s18
      %s21 = sphi 0, %s19
      %s22 = sphi 0, %s20
      %s23 = sphi 0, %s21
      %s35 = sphi 0, %s37
      %s38 = sphi 0, %s35
      %s39 = sphi 0, %s38
      %s55 = sphi 0, %s39
      %s61 = sphi 0, %s63
      %s64 = sphi 0, %s61
      %s65 = sphi 0, %s64
      %s81 = sphi 0, %s65
      %s87 = sphi 0, %s89
      %s90 = sphi 0, %s87
      %s91 = sphi 0, %s90
      %s107 = sphi 0, %s91
      %s113 = sphi 0, %s115
      %s116 = sphi 0, %s113
      %s117 = sphi 0, %s116
      %s133 = sphi 0, %s117
      %s139 = sphi 0, %s141
      %s142 = sphi 0, %s139
      %s143 = sphi 0, %s142
      %s159 = sphi 0, %s143
    $region4: #{basic_conv_forward.2} parent=1 // loop_header_branch
      %14 = sbr.rel (%p12) target = $region8
    $region5: #{basic_conv_forward.2} parent=1 // loop_body
      %s16 = ssub.s32 %s11, 1
      %s17 = ssub.s32 %s11, 2
      %s24 = sadd.s32 1, %s19
      %p25 = scmp.ge.s32.totalorder %s24, 2
      %s26 = scalar_select %p25, 0, %s24
      %s27 = sadd.s32 1, %s18
      %s28 = scalar_select %p25, %s27, %s18
      %p29 = scmp.ge.s32.totalorder %s28, 2
      %s30 = scalar_select %p29, 0, %s28
      %s31 = ssub.s32 %s18, %s30
      %s32 = ssub.s32 %s19, %s26
      %s33 = sor.u32 %s31, %s32
      %p34 = scmp.eq.s32.totalorder %s33, 0
      %s36 = sadd.s32 %s35, 1
      %s37 = scalar_select %p34, %s35, %s36
      %p40 = pneg %p34
      %p41 = scmp.eq.s32.totalorder %s11, 3
      %p42 = por %p40, %p41
      %p43 = scmp.ne.s32.totalorder %s35, %s38
      %p44 = scmp.eq.s32.totalorder %s11, 0
      %p45 = por %p43, %p44
      %p46 = scmp.ne.s32.totalorder %s35, %s38
      %p47 = scmp.eq.s32.totalorder %s16, 3
      %p48 = por %p46, %p47
      %p49 = scmp.ne.s32.totalorder %s38, %s39
      %p50 = scmp.eq.s32.totalorder %s16, 0
      %p51 = por %p49, %p50
      %p52 = scmp.ne.s32.totalorder %s38, %s39
      %p53 = scmp.eq.s32.totalorder %s17, 3
      %p54 = por %p52, %p53
      %p56 = scmp.ne.s32.totalorder %s39, %s55
      %p57 = scmp.eq.s32.totalorder %s17, 0
      %p58 = por %p56, %p57
      %s59 = ssub.s32 %s19, %s26
      %p60 = scmp.eq.s32.totalorder %s59, 0
      %s62 = sadd.s32 %s61, 1
      %s63 = scalar_select %p60, %s61, %s62
      %p66 = pneg %p60
      %p67 = scmp.eq.s32.totalorder %s11, 3
      %p68 = por %p66, %p67
      %p69 = scmp.ne.s32.totalorder %s61, %s64
      %p70 = scmp.eq.s32.totalorder %s11, 0
      %p71 = por %p69, %p70
      %p72 = scmp.ne.s32.totalorder %s61, %s64
      %p73 = scmp.eq.s32.totalorder %s16, 3
      %p74 = por %p72, %p73
      %p75 = scmp.ne.s32.totalorder %s64, %s65
      %p76 = scmp.eq.s32.totalorder %s16, 0
      %p77 = por %p75, %p76
      %p78 = scmp.ne.s32.totalorder %s64, %s65
      %p79 = scmp.eq.s32.totalorder %s17, 3
      %p80 = por %p78, %p79
      %p82 = scmp.ne.s32.totalorder %s65, %s81
      %p83 = scmp.eq.s32.totalorder %s17, 0
      %p84 = por %p82, %p83
      %s85 = ssub.s32 %s18, %s30
      %p86 = scmp.eq.s32.totalorder %s85, 0
      %s88 = sadd.s32 %s87, 1
      %s89 = scalar_select %p86, %s87, %s88
      %p92 = pneg %p86
      %p93 = scmp.eq.s32.totalorder %s11, 3
      %p94 = por %p92, %p93
      %p95 = scmp.ne.s32.totalorder %s87, %s90
      %p96 = scmp.eq.s32.totalorder %s11, 0
      %p97 = por %p95, %p96
      %p98 = scmp.ne.s32.totalorder %s87, %s90
      %p99 = scmp.eq.s32.totalorder %s16, 3
      %p100 = por %p98, %p99
      %p101 = scmp.ne.s32.totalorder %s90, %s91
      %p102 = scmp.eq.s32.totalorder %s16, 0
      %p103 = por %p101, %p102
      %p104 = scmp.ne.s32.totalorder %s90, %s91
      %p105 = scmp.eq.s32.totalorder %s17, 3
      %p106 = por %p104, %p105
      %p108 = scmp.ne.s32.totalorder %s91, %s107
      %p109 = scmp.eq.s32.totalorder %s17, 0
      %p110 = por %p108, %p109
      %s111 = ssub.s32 %s18, %s30
      %p112 = scmp.eq.s32.totalorder %s111, 0
      %s114 = sadd.s32 %s113, 1
      %s115 = scalar_select %p112, %s113, %s114
      %p118 = pneg %p112
      %p119 = scmp.eq.s32.totalorder %s11, 3
      %p120 = por %p118, %p119
      %p121 = scmp.ne.s32.totalorder %s113, %s116
      %p122 = scmp.eq.s32.totalorder %s11, 0
      %p123 = por %p121, %p122
      %p124 = scmp.ne.s32.totalorder %s113, %s116
      %p125 = scmp.eq.s32.totalorder %s16, 3
      %p126 = por %p124, %p125
      %p127 = scmp.ne.s32.totalorder %s116, %s117
      %p128 = scmp.eq.s32.totalorder %s16, 0
      %p129 = por %p127, %p128
      %p130 = scmp.ne.s32.totalorder %s116, %s117
      %p131 = scmp.eq.s32.totalorder %s17, 3
      %p132 = por %p130, %p131
      %p134 = scmp.ne.s32.totalorder %s117, %s133
      %p135 = scmp.eq.s32.totalorder %s17, 0
      %p136 = por %p134, %p135
      %s137 = ssub.s32 %s18, %s30
      %p138 = scmp.eq.s32.totalorder %s137, 0
      %s140 = sadd.s32 %s139, 1
      %s141 = scalar_select %p138, %s139, %s140
      %p144 = pneg %p138
      %p145 = scmp.eq.s32.totalorder %s11, 3
      %p146 = por %p144, %p145
      %p147 = scmp.ne.s32.totalorder %s139, %s142
      %p148 = scmp.eq.s32.totalorder %s11, 0
      %p149 = por %p147, %p148
      %p150 = scmp.ne.s32.totalorder %s139, %s142
      %p151 = scmp.eq.s32.totalorder %s16, 3
      %p152 = por %p150, %p151
      %p153 = scmp.ne.s32.totalorder %s142, %s143
      %p154 = scmp.eq.s32.totalorder %s16, 0
      %p155 = por %p153, %p154
      %p156 = scmp.ne.s32.totalorder %s142, %s143
      %p157 = scmp.eq.s32.totalorder %s17, 3
      %p158 = por %p156, %p157
      %p160 = scmp.ne.s32.totalorder %s143, %s159
      %p161 = scmp.eq.s32.totalorder %s17, 0
      %p162 = por %p160, %p161
      %p163 = scmp.le.s32.totalorder 1, %s11
      %p164 = scmp.lt.s32.totalorder %s11, 5
      %p165 = pnand %p163, %p164
      %p166 = pneg %p165
      // Predicated region
      $region9: #{basic_conv_forward.2} parent=5 // pred_check
        _
      $region10: #{basic_conv_forward.2} parent=5 // pred_check_branch
        %168 = sbr.rel (%p165) target = $region12
      $region11: #{basic_conv_forward.2} parent=5 // pred_region
        %s169 = ssub.s32 %s11, 1
      $region12: #{basic_conv_forward.2} parent=5 // pred_fallthru
        _
      %p170 = scmp.lt.s32.totalorder %s11, 4
      // Predicated region
      $region13: #{basic_conv_forward.2} parent=5 // pred_check
        %p171 = pneg %p170
      $region14: #{basic_conv_forward.2} parent=5 // pred_check_branch
        %173 = sbr.rel (%p171) target = $region16
      $region15: #{basic_conv_forward.2} parent=5 // pred_region
        // Predicated region
        $region17: #{basic_conv_forward.2} parent=15 // pred_check
          %p174 = pneg %p45
        $region18: #{basic_conv_forward.2} parent=15 // pred_check_branch
          %176 = sbr.rel (%p174) target = $region20
        $region19: #{basic_conv_forward.2} parent=15 // pred_region
          %s177 = sand.u32 %s35, 1
          %s178 = sand.u32 %s35, 1
          %s179 = smul.addr %s178, 128
          %s180 = scalar_lea.vmem [#allocation3], %s179
          %s181 = smul.u32 32, %s18
          %s182 = smul.addr %s181, 2
          %s183 = sadd.s32 %s19, %s182
          %s184 = smul.addr %s183, 4
          %s185 = scalar_lea.vmem %s0, %s184
          // Predicated region
          $region21: #{basic_conv_forward.2} parent=19 // pred_check
            _
          $region22: #{basic_conv_forward.2} parent=19 // pred_check_branch
            %187 = sbr.rel (0) target = $region24
          $region23: #{basic_conv_forward.2} parent=19 // pred_region
            // Predicated region
            $region25: #{basic_conv_forward.2} parent=23 // pred_check
              _
            $region26: #{basic_conv_forward.2} parent=23 // pred_check_branch
              %189 = sbr.rel target = $region28
            $region27: #{basic_conv_forward.2} parent=23 // pred_region
              // Predicated region
              $region40: #{basic_conv_forward.2} parent=27 // pred_check
                _
              $region41: #{basic_conv_forward.2} parent=27 // pred_check_branch
                %267 = sbr.rel (0) target = $region43
              $region42: #{basic_conv_forward.2} parent=27 // pred_region
                loop: start=0, step=1, limit=1
                $region44: #{basic_conv_forward.2} parent=42 // loop_pre_header
                  _
                $region45: #{basic_conv_forward.2} parent=42 // loop_header
                  %s269 = sphi 0, %s273
                  %p270 = scmp.ge.s32.totalorder %s269, 1
                  %s274 = sphi %s185, %s185
                  %s275 = sphi %s180, %s180
                $region46: #{basic_conv_forward.2} parent=42 // loop_header_branch
                  %272 = sbr.rel (%p270) target = $region50
                $region47: #{basic_conv_forward.2} parent=42 // loop_body
                  _
                $region48: #{basic_conv_forward.2} parent=42 // loop_footer
                  %s273 = sadd.s32 1, %s269
                $region49: #{basic_conv_forward.2} parent=42 // loop_footer_branch
                  %268 = sbr.rel target = $region45
                $region50: #{basic_conv_forward.2} parent=42 // loop_exit
                  _
                %s277 = ssub.s32 16, 1
                loop: start=0, step=1, limit=1
                $region51: #{basic_conv_forward.2} parent=42 // loop_pre_header
                  _
                $region52: #{basic_conv_forward.2} parent=42 // loop_header
                  %s279 = sphi 0, %s283
                  %p280 = scmp.ge.s32.totalorder %s279, 1
                  %s284 = sphi %s185, %s185
                  %s285 = sphi %s180, %s180
                $region53: #{basic_conv_forward.2} parent=42 // loop_header_branch
                  %282 = sbr.rel (%p280) target = $region57
                $region54: #{basic_conv_forward.2} parent=42 // loop_body
                  %v286 = vld [vmem:[%s284] sm:%s277]
                  %287 = vst [vmem:[%s285] sm:%s277] %v286
                  %v288 = vld [vmem:[%s284 + $0x8] sm:%s277]
                  %289 = vst [vmem:[%s285 + $0x4] sm:%s277] %v288
                  %v290 = vld [vmem:[%s284 + $0x10] sm:%s277]
                  %291 = vst [vmem:[%s285 + $0x8] sm:%s277] %v290
                  %v292 = vld [vmem:[%s284 + $0x18] sm:%s277]
                  %293 = vst [vmem:[%s285 + $0xc] sm:%s277] %v292
                  %v294 = vld [vmem:[%s284 + $0x20] sm:%s277]
                  %295 = vst [vmem:[%s285 + $0x10] sm:%s277] %v294
                  %v296 = vld [vmem:[%s284 + $0x28] sm:%s277]
                  %297 = vst [vmem:[%s285 + $0x14] sm:%s277] %v296
                  %v298 = vld [vmem:[%s284 + $0x30] sm:%s277]
                  %299 = vst [vmem:[%s285 + $0x18] sm:%s277] %v298
                  %v300 = vld [vmem:[%s284 + $0x38] sm:%s277]
                  %301 = vst [vmem:[%s285 + $0x1c] sm:%s277] %v300
                  %v302 = vld [vmem:[%s284 + $0x40] sm:%s277]
                  %303 = vst [vmem:[%s285 + $0x20] sm:%s277] %v302
                  %v304 = vld [vmem:[%s284 + $0x48] sm:%s277]
                  %305 = vst [vmem:[%s285 + $0x24] sm:%s277] %v304
                  %v306 = vld [vmem:[%s284 + $0x50] sm:%s277]
                  %307 = vst [vmem:[%s285 + $0x28] sm:%s277] %v306
                  %v308 = vld [vmem:[%s284 + $0x58] sm:%s277]
                  %309 = vst [vmem:[%s285 + $0x2c] sm:%s277] %v308
                  %v310 = vld [vmem:[%s284 + $0x60] sm:%s277]
                  %311 = vst [vmem:[%s285 + $0x30] sm:%s277] %v310
                  %v312 = vld [vmem:[%s284 + $0x68] sm:%s277]
                  %313 = vst [vmem:[%s285 + $0x34] sm:%s277] %v312
                  %v314 = vld [vmem:[%s284 + $0x70] sm:%s277]
                  %315 = vst [vmem:[%s285 + $0x38] sm:%s277] %v314
                  %v316 = vld [vmem:[%s284 + $0x78] sm:%s277]
                  %317 = vst [vmem:[%s285 + $0x3c] sm:%s277] %v316
                  %v318 = vld [vmem:[%s284 + $0x80] sm:%s277]
                  %319 = vst [vmem:[%s285 + $0x40] sm:%s277] %v318
                  %v320 = vld [vmem:[%s284 + $0x88] sm:%s277]
                  %321 = vst [vmem:[%s285 + $0x44] sm:%s277] %v320
                  %v322 = vld [vmem:[%s284 + $0x90] sm:%s277]
                  %323 = vst [vmem:[%s285 + $0x48] sm:%s277] %v322
                  %v324 = vld [vmem:[%s284 + $0x98] sm:%s277]
                  %325 = vst [vmem:[%s285 + $0x4c] sm:%s277] %v324
                  %v326 = vld [vmem:[%s284 + $0xa0] sm:%s277]
                  %327 = vst [vmem:[%s285 + $0x50] sm:%s277] %v326
                  %v328 = vld [vmem:[%s284 + $0xa8] sm:%s277]
                  %329 = vst [vmem:[%s285 + $0x54] sm:%s277] %v328
                  %v330 = vld [vmem:[%s284 + $0xb0] sm:%s277]
                  %331 = vst [vmem:[%s285 + $0x58] sm:%s277] %v330
                  %v332 = vld [vmem:[%s284 + $0xb8] sm:%s277]
                  %333 = vst [vmem:[%s285 + $0x5c] sm:%s277] %v332
                  %v334 = vld [vmem:[%s284 + $0xc0] sm:%s277]
                  %335 = vst [vmem:[%s285 + $0x60] sm:%s277] %v334
                  %v336 = vld [vmem:[%s284 + $0xc8] sm:%s277]
                  %337 = vst [vmem:[%s285 + $0x64] sm:%s277] %v336
                  %v338 = vld [vmem:[%s284 + $0xd0] sm:%s277]
                  %339 = vst [vmem:[%s285 + $0x68] sm:%s277] %v338
                  %v340 = vld [vmem:[%s284 + $0xd8] sm:%s277]
                  %341 = vst [vmem:[%s285 + $0x6c] sm:%s277] %v340
                  %v342 = vld [vmem:[%s284 + $0xe0] sm:%s277]
                  %343 = vst [vmem:[%s285 + $0x70] sm:%s277] %v342
                  %v344 = vld [vmem:[%s284 + $0xe8] sm:%s277]
                  %345 = vst [vmem:[%s285 + $0x74] sm:%s277] %v344
                  %v346 = vld [vmem:[%s284 + $0xf0] sm:%s277]
                  %347 = vst [vmem:[%s285 + $0x78] sm:%s277] %v346
                  %v348 = vld [vmem:[%s284 + $0xf8] sm:%s277]
                  %349 = vst [vmem:[%s285 + $0x7c] sm:%s277] %v348
                $region55: #{basic_conv_forward.2} parent=42 // loop_footer
                  %s283 = sadd.s32 1, %s279
                $region56: #{basic_conv_forward.2} parent=42 // loop_footer_branch
                  %278 = sbr.rel target = $region52
                $region57: #{basic_conv_forward.2} parent=42 // loop_exit
                  _
              $region43: #{basic_conv_forward.2} parent=27 // pred_fallthru
                _
            $region28: #{basic_conv_forward.2} parent=23 // pred_fallthru
              _
            // Predicated region
            $region29: #{basic_conv_forward.2} parent=23 // pred_check
              _
            $region30: #{basic_conv_forward.2} parent=23 // pred_check_branch
              %191 = sbr.rel (0) target = $region32
            $region31: #{basic_conv_forward.2} parent=23 // pred_region
              %s193 = ssub.s32 16, 1
              loop: start=0, step=1, limit=1
              $region33: #{basic_conv_forward.2} parent=31 // loop_pre_header
                _
              $region34: #{basic_conv_forward.2} parent=31 // loop_header
                %s195 = sphi 0, %s199
                %p196 = scmp.ge.s32.totalorder %s195, 1
                %s200 = sphi %s185, %s185
                %s201 = sphi %s180, %s180
              $region35: #{basic_conv_forward.2} parent=31 // loop_header_branch
                %198 = sbr.rel (%p196) target = $region39
              $region36: #{basic_conv_forward.2} parent=31 // loop_body
                %v202 = vld [vmem:[%s200] sm:%s193]
                %203 = vst [vmem:[%s201] sm:%s193] %v202
                %v204 = vld [vmem:[%s200 + $0x8] sm:%s193]
                %205 = vst [vmem:[%s201 + $0x4] sm:%s193] %v204
                %v206 = vld [vmem:[%s200 + $0x10] sm:%s193]
                %207 = vst [vmem:[%s201 + $0x8] sm:%s193] %v206
                %v208 = vld [vmem:[%s200 + $0x18] sm:%s193]
                %209 = vst [vmem:[%s201 + $0xc] sm:%s193] %v208
                %v210 = vld [vmem:[%s200 + $0x20] sm:%s193]
                %211 = vst [vmem:[%s201 + $0x10] sm:%s193] %v210
                %v212 = vld [vmem:[%s200 + $0x28] sm:%s193]
                %213 = vst [vmem:[%s201 + $0x14] sm:%s193] %v212
                %v214 = vld [vmem:[%s200 + $0x30] sm:%s193]
                %215 = vst [vmem:[%s201 + $0x18] sm:%s193] %v214
                %v216 = vld [vmem:[%s200 + $0x38] sm:%s193]
                %217 = vst [vmem:[%s201 + $0x1c] sm:%s193] %v216
                %v218 = vld [vmem:[%s200 + $0x40] sm:%s193]
                %219 = vst [vmem:[%s201 + $0x20] sm:%s193] %v218
                %v220 = vld [vmem:[%s200 + $0x48] sm:%s193]
                %221 = vst [vmem:[%s201 + $0x24] sm:%s193] %v220
                %v222 = vld [vmem:[%s200 + $0x50] sm:%s193]
                %223 = vst [vmem:[%s201 + $0x28] sm:%s193] %v222
                %v224 = vld [vmem:[%s200 + $0x58] sm:%s193]
                %225 = vst [vmem:[%s201 + $0x2c] sm:%s193] %v224
                %v226 = vld [vmem:[%s200 + $0x60] sm:%s193]
                %227 = vst [vmem:[%s201 + $0x30] sm:%s193] %v226
                %v228 = vld [vmem:[%s200 + $0x68] sm:%s193]
                %229 = vst [vmem:[%s201 + $0x34] sm:%s193] %v228
                %v230 = vld [vmem:[%s200 + $0x70] sm:%s193]
                %231 = vst [vmem:[%s201 + $0x38] sm:%s193] %v230
                %v232 = vld [vmem:[%s200 + $0x78] sm:%s193]
                %233 = vst [vmem:[%s201 + $0x3c] sm:%s193] %v232
                %v234 = vld [vmem:[%s200 + $0x80] sm:%s193]
                %235 = vst [vmem:[%s201 + $0x40] sm:%s193] %v234
                %v236 = vld [vmem:[%s200 + $0x88] sm:%s193]
                %237 = vst [vmem:[%s201 + $0x44] sm:%s193] %v236
                %v238 = vld [vmem:[%s200 + $0x90] sm:%s193]
                %239 = vst [vmem:[%s201 + $0x48] sm:%s193] %v238
                %v240 = vld [vmem:[%s200 + $0x98] sm:%s193]
                %241 = vst [vmem:[%s201 + $0x4c] sm:%s193] %v240
                %v242 = vld [vmem:[%s200 + $0xa0] sm:%s193]
                %243 = vst [vmem:[%s201 + $0x50] sm:%s193] %v242
                %v244 = vld [vmem:[%s200 + $0xa8] sm:%s193]
                %245 = vst [vmem:[%s201 + $0x54] sm:%s193] %v244
                %v246 = vld [vmem:[%s200 + $0xb0] sm:%s193]
                %247 = vst [vmem:[%s201 + $0x58] sm:%s193] %v246
                %v248 = vld [vmem:[%s200 + $0xb8] sm:%s193]
                %249 = vst [vmem:[%s201 + $0x5c] sm:%s193] %v248
                %v250 = vld [vmem:[%s200 + $0xc0] sm:%s193]
                %251 = vst [vmem:[%s201 + $0x60] sm:%s193] %v250
                %v252 = vld [vmem:[%s200 + $0xc8] sm:%s193]
                %253 = vst [vmem:[%s201 + $0x64] sm:%s193] %v252
                %v254 = vld [vmem:[%s200 + $0xd0] sm:%s193]
                %255 = vst [vmem:[%s201 + $0x68] sm:%s193] %v254
                %v256 = vld [vmem:[%s200 + $0xd8] sm:%s193]
                %257 = vst [vmem:[%s201 + $0x6c] sm:%s193] %v256
                %v258 = vld [vmem:[%s200 + $0xe0] sm:%s193]
                %259 = vst [vmem:[%s201 + $0x70] sm:%s193] %v258
                %v260 = vld [vmem:[%s200 + $0xe8] sm:%s193]
                %261 = vst [vmem:[%s201 + $0x74] sm:%s193] %v260
                %v262 = vld [vmem:[%s200 + $0xf0] sm:%s193]
                %263 = vst [vmem:[%s201 + $0x78] sm:%s193] %v262
                %v264 = vld [vmem:[%s200 + $0xf8] sm:%s193]
                %265 = vst [vmem:[%s201 + $0x7c] sm:%s193] %v264
              $region37: #{basic_conv_forward.2} parent=31 // loop_footer
                %s199 = sadd.s32 1, %s195
              $region38: #{basic_conv_forward.2} parent=31 // loop_footer_branch
                %194 = sbr.rel target = $region34
              $region39: #{basic_conv_forward.2} parent=31 // loop_exit
                _
            $region32: #{basic_conv_forward.2} parent=23 // pred_fallthru
              _
          $region24: #{basic_conv_forward.2} parent=19 // pred_fallthru
            _
          %350 = vnop
        $region20: #{basic_conv_forward.2} parent=15 // pred_fallthru
          _
        // Predicated region
        $region58: #{basic_conv_forward.2} parent=15 // pred_check
          %p351 = pneg %p71
        $region59: #{basic_conv_forward.2} parent=15 // pred_check_branch
          %353 = sbr.rel (%p351) target = $region61
        $region60: #{basic_conv_forward.2} parent=15 // pred_region
          %s354 = smul.u32 16, %s19
          %p355 = scmp.lt.s32.totalorder %s354, 31
          %s356 = scalar_select %p355, %s354, 31
          %s357 = smul.addr %s356, 4
          %s358 = scalar_lea.vmem %s1, %s357
          %s359 = smul.u32 16, %s19
        $region61: #{basic_conv_forward.2} parent=15 // pred_fallthru
          _
      $region16: #{basic_conv_forward.2} parent=5 // pred_fallthru
        _
      %p360 = scmp.le.s32.totalorder 1, %s11
      %p361 = scmp.lt.s32.totalorder %s11, 5
      %p362 = pnand %p360, %p361
      %p363 = pneg %p362
      // Predicated region
      $region62: #{basic_conv_forward.2} parent=5 // pred_check
        _
      $region63: #{basic_conv_forward.2} parent=5 // pred_check_branch
        %365 = sbr.rel (%p362) target = $region65
      $region64: #{basic_conv_forward.2} parent=5 // pred_region
        %s366 = ssub.s32 %s11, 1
        %s367 = sand.u32 %s38, 1
        %s368 = sand.u32 %s38, 1
        %s369 = smul.addr %s368, 128
        %s370 = scalar_lea.vmem [#allocation3], %s369
        // Predicated region
        $region66: #{basic_conv_forward.2} parent=64 // pred_check
          %p371 = pneg %p51
        $region67: #{basic_conv_forward.2} parent=64 // pred_check_branch
          %373 = sbr.rel (%p371) target = $region69
        $region68: #{basic_conv_forward.2} parent=64 // pred_region
          _
        $region69: #{basic_conv_forward.2} parent=64 // pred_fallthru
          _
        %s374 = sand.u32 %s38, 1
        %s375 = sand.u32 %s38, 1
        %s376 = smul.addr %s375, 128
        %s377 = scalar_lea.vmem [#allocation3], %s376
        %p378 = pneg %p51
        %p379 = pneg %p48
        %s380 = smul.u32 16, %s21
        %p381 = scmp.lt.s32.totalorder %s380, 31
        %s382 = scalar_select %p381, %s380, 31
        %s383 = smul.addr %s382, 4
        %s384 = scalar_lea.vmem %s1, %s383
        %p385 = pneg %p77
        %p386 = pneg %p74
        %p387 = pneg %p103
        %p388 = pneg %p100
        %s389 = smul.u32 32, %s20
        %p390 = scmp.lt.s32.totalorder %s389, 63
        %s391 = scalar_select %p390, %s389, 63
        %s392 = smul.addr %s391, 8
        %s393 = scalar_lea.vmem %s2, %s392
        %p394 = pneg %p129
        %p395 = pneg %p126
        %p396 = scmp.lt.s32.totalorder %s20, 1
        %s397 = scalar_select %p396, %s20, 1
        %s398 = smul.addr %s397, 8
        %s399 = scalar_lea.vmem %s3, %s398
        %p400 = pneg %p155
        %p401 = pneg %p152
        %p402 = scmp.lt.s32.totalorder %s20, 1
        %s403 = scalar_select %p402, %s20, 1
        %s404 = smul.addr %s403, 8
        %s405 = scalar_lea.vmem %s4, %s404
        %s406 = smul.u32 32, %s20
        %s407 = smul.u32 16, %s21
        %p408 = scmp.lt.s32.totalorder %s407, 31
        %s409 = scalar_select %p408, %s407, 31
        %s410 = smul.addr %s409, 4
        %s411 = scalar_lea.vmem %s1, %s410
        %s412 = smul.u32 16, %s21
        %s413 = smul.u32 32, %s20
        %p414 = scmp.lt.s32.totalorder %s413, 63
        %s415 = scalar_select %p414, %s413, 63
        %s416 = smul.addr %s415, 8
        %s417 = scalar_lea.vmem %s2, %s416
        %s418 = smul.u32 32, %s20
        %p419 = scmp.lt.s32.totalorder %s20, 1
        %s420 = scalar_select %p419, %s20, 1
        %s421 = smul.addr %s420, 8
        %s422 = scalar_lea.vmem %s3, %s421
        %p423 = scmp.lt.s32.totalorder %s20, 1
        %s424 = scalar_select %p423, %s20, 1
        %s425 = smul.addr %s424, 8
        %s426 = scalar_lea.vmem %s4, %s425
        %p427 = scmp.eq.s32.totalorder %s21, 0
        // Predicated region
        $region70: #{basic_conv_forward.2} parent=64 // pred_check
          %p428 = pneg %p427
        $region71: #{basic_conv_forward.2} parent=64 // pred_check_branch
          %430 = sbr.rel (%p428) target = $region73
        $region72: #{basic_conv_forward.2} parent=64 // pred_region
          %431 = vst [vmem:[#allocation2] sm:$0xff] 0.0
          %432 = vst [vmem:[#allocation2 + $0x8] sm:$0xff] 0.0
          %433 = vst [vmem:[#allocation2 + $0x10] sm:$0xff] 0.0
          %434 = vst [vmem:[#allocation2 + $0x18] sm:$0xff] 0.0
          %435 = vst [vmem:[#allocation2 + $0x20] sm:$0xff] 0.0
          %436 = vst [vmem:[#allocation2 + $0x28] sm:$0xff] 0.0
          %437 = vst [vmem:[#allocation2 + $0x30] sm:$0xff] 0.0
          %438 = vst [vmem:[#allocation2 + $0x38] sm:$0xff] 0.0
          %439 = vst [vmem:[#allocation2 + $0x40] sm:$0xff] 0.0
          %440 = vst [vmem:[#allocation2 + $0x48] sm:$0xff] 0.0
          %441 = vst [vmem:[#allocation2 + $0x50] sm:$0xff] 0.0
          %442 = vst [vmem:[#allocation2 + $0x58] sm:$0xff] 0.0
          %443 = vst [vmem:[#allocation2 + $0x60] sm:$0xff] 0.0
          %444 = vst [vmem:[#allocation2 + $0x68] sm:$0xff] 0.0
          %445 = vst [vmem:[#allocation2 + $0x70] sm:$0xff] 0.0
          %446 = vst [vmem:[#allocation2 + $0x78] sm:$0xff] 0.0
          %447 = vst [vmem:[#allocation2 + $0x80] sm:$0xff] 0.0
          %448 = vst [vmem:[#allocation2 + $0x88] sm:$0xff] 0.0
          %449 = vst [vmem:[#allocation2 + $0x90] sm:$0xff] 0.0
          %450 = vst [vmem:[#allocation2 + $0x98] sm:$0xff] 0.0
          %451 = vst [vmem:[#allocation2 + $0xa0] sm:$0xff] 0.0
          %452 = vst [vmem:[#allocation2 + $0xa8] sm:$0xff] 0.0
          %453 = vst [vmem:[#allocation2 + $0xb0] sm:$0xff] 0.0
          %454 = vst [vmem:[#allocation2 + $0xb8] sm:$0xff] 0.0
          %455 = vst [vmem:[#allocation2 + $0xc0] sm:$0xff] 0.0
          %456 = vst [vmem:[#allocation2 + $0xc8] sm:$0xff] 0.0
          %457 = vst [vmem:[#allocation2 + $0xd0] sm:$0xff] 0.0
          %458 = vst [vmem:[#allocation2 + $0xd8] sm:$0xff] 0.0
          %459 = vst [vmem:[#allocation2 + $0xe0] sm:$0xff] 0.0
          %460 = vst [vmem:[#allocation2 + $0xe8] sm:$0xff] 0.0
          %461 = vst [vmem:[#allocation2 + $0xf0] sm:$0xff] 0.0
          %462 = vst [vmem:[#allocation2 + $0xf8] sm:$0xff] 0.0
        $region73: #{basic_conv_forward.2} parent=64 // pred_fallthru
          _
        %v463 = vld [vmem:[#allocation2] sm:$0xff]
        %v464 = vld [vmem:[#allocation2 + $0x8] sm:$0xff]
        %v465 = vld [vmem:[#allocation2 + $0x10] sm:$0xff]
        %v466 = vld [vmem:[#allocation2 + $0x18] sm:$0xff]
        %v467 = vld [vmem:[#allocation2 + $0x20] sm:$0xff]
        %v468 = vld [vmem:[#allocation2 + $0x28] sm:$0xff]
        %v469 = vld [vmem:[#allocation2 + $0x30] sm:$0xff]
        %v470 = vld [vmem:[#allocation2 + $0x38] sm:$0xff]
        %v471 = vld [vmem:[#allocation2 + $0x40] sm:$0xff]
        %v472 = vld [vmem:[#allocation2 + $0x48] sm:$0xff]
        %v473 = vld [vmem:[#allocation2 + $0x50] sm:$0xff]
        %v474 = vld [vmem:[#allocation2 + $0x58] sm:$0xff]
        %v475 = vld [vmem:[#allocation2 + $0x60] sm:$0xff]
        %v476 = vld [vmem:[#allocation2 + $0x68] sm:$0xff]
        %v477 = vld [vmem:[#allocation2 + $0x70] sm:$0xff]
        %v478 = vld [vmem:[#allocation2 + $0x78] sm:$0xff]
        %v479 = vld [vmem:[#allocation2 + $0x80] sm:$0xff]
        %v480 = vld [vmem:[#allocation2 + $0x88] sm:$0xff]
        %v481 = vld [vmem:[#allocation2 + $0x90] sm:$0xff]
        %v482 = vld [vmem:[#allocation2 + $0x98] sm:$0xff]
        %v483 = vld [vmem:[#allocation2 + $0xa0] sm:$0xff]
        %v484 = vld [vmem:[#allocation2 + $0xa8] sm:$0xff]
        %v485 = vld [vmem:[#allocation2 + $0xb0] sm:$0xff]
        %v486 = vld [vmem:[#allocation2 + $0xb8] sm:$0xff]
        %v487 = vld [vmem:[#allocation2 + $0xc0] sm:$0xff]
        %v488 = vld [vmem:[#allocation2 + $0xc8] sm:$0xff]
        %v489 = vld [vmem:[#allocation2 + $0xd0] sm:$0xff]
        %v490 = vld [vmem:[#allocation2 + $0xd8] sm:$0xff]
        %v491 = vld [vmem:[#allocation2 + $0xe0] sm:$0xff]
        %v492 = vld [vmem:[#allocation2 + $0xe8] sm:$0xff]
        %v493 = vld [vmem:[#allocation2 + $0xf0] sm:$0xff]
        %v494 = vld [vmem:[#allocation2 + $0xf8] sm:$0xff]
        %v495 = vld [vmem:[%s370] sm:$0xf]
        %v496 = vld [vmem:[%s370 + $0x4] sm:$0xf]
        %v497 = vld [vmem:[%s370 + $0x8] sm:$0xf]
        %v498 = vld [vmem:[%s370 + $0xc] sm:$0xf]
        %v499 = vld [vmem:[%s370 + $0x10] sm:$0xf]
        %v500 = vld [vmem:[%s370 + $0x14] sm:$0xf]
        %v501 = vld [vmem:[%s370 + $0x18] sm:$0xf]
        %v502 = vld [vmem:[%s370 + $0x1c] sm:$0xf]
        %v503 = vld [vmem:[%s370 + $0x20] sm:$0xf]
        %v504 = vld [vmem:[%s370 + $0x24] sm:$0xf]
        %v505 = vld [vmem:[%s370 + $0x28] sm:$0xf]
        %v506 = vld [vmem:[%s370 + $0x2c] sm:$0xf]
        %v507 = vld [vmem:[%s370 + $0x30] sm:$0xf]
        %v508 = vld [vmem:[%s370 + $0x34] sm:$0xf]
        %v509 = vld [vmem:[%s370 + $0x38] sm:$0xf]
        %v510 = vld [vmem:[%s370 + $0x3c] sm:$0xf]
        %v511 = vld [vmem:[%s370 + $0x40] sm:$0xf]
        %v512 = vld [vmem:[%s370 + $0x44] sm:$0xf]
        %v513 = vld [vmem:[%s370 + $0x48] sm:$0xf]
        %v514 = vld [vmem:[%s370 + $0x4c] sm:$0xf]
        %v515 = vld [vmem:[%s370 + $0x50] sm:$0xf]
        %v516 = vld [vmem:[%s370 + $0x54] sm:$0xf]
        %v517 = vld [vmem:[%s370 + $0x58] sm:$0xf]
        %v518 = vld [vmem:[%s370 + $0x5c] sm:$0xf]
        %v519 = vld [vmem:[%s370 + $0x60] sm:$0xf]
        %v520 = vld [vmem:[%s370 + $0x64] sm:$0xf]
        %v521 = vld [vmem:[%s370 + $0x68] sm:$0xf]
        %v522 = vld [vmem:[%s370 + $0x6c] sm:$0xf]
        %v523 = vld [vmem:[%s370 + $0x70] sm:$0xf]
        %v524 = vld [vmem:[%s370 + $0x74] sm:$0xf]
        %v525 = vld [vmem:[%s370 + $0x78] sm:$0xf]
        %v526 = vld [vmem:[%s370 + $0x7c] sm:$0xf]
        %v527 = vld [vmem:[%s411] sm:$0xf]
        %v528 = vld [vmem:[%s411 + $0x4] sm:$0xf]
        %v529 = vld [vmem:[%s411 + $0x8] sm:$0xf]
        %v530 = vld [vmem:[%s411 + $0xc] sm:$0xf]
        %v531 = vld [vmem:[%s411 + $0x10] sm:$0xf]
        %v532 = vld [vmem:[%s411 + $0x14] sm:$0xf]
        %v533 = vld [vmem:[%s411 + $0x18] sm:$0xf]
        %v534 = vld [vmem:[%s411 + $0x1c] sm:$0xf]
        %v535 = vld [vmem:[%s411 + $0x20] sm:$0xf]
        %v536 = vld [vmem:[%s411 + $0x24] sm:$0xf]
        %v537 = vld [vmem:[%s411 + $0x28] sm:$0xf]
        %v538 = vld [vmem:[%s411 + $0x2c] sm:$0xf]
        %v539 = vld [vmem:[%s411 + $0x30] sm:$0xf]
        %v540 = vld [vmem:[%s411 + $0x34] sm:$0xf]
        %v541 = vld [vmem:[%s411 + $0x38] sm:$0xf]
        %v542 = vld [vmem:[%s411 + $0x3c] sm:$0xf]
        %v575 = vunpack.c.l.b16 %v495
        %v576 = vunpack.c.l.b16 %v496
        %v577 = vunpack.c.l.b16 %v497
        %v578 = vunpack.c.l.b16 %v498
        %v579 = vunpack.c.l.b16 %v499
        %v580 = vunpack.c.l.b16 %v500
        %v581 = vunpack.c.l.b16 %v501
        %v582 = vunpack.c.l.b16 %v502
        %v583 = vunpack.c.l.b16 %v503
        %v584 = vunpack.c.l.b16 %v504
        %v585 = vunpack.c.l.b16 %v505
        %v586 = vunpack.c.l.b16 %v506
        %v587 = vunpack.c.l.b16 %v507
        %v588 = vunpack.c.l.b16 %v508
        %v589 = vunpack.c.l.b16 %v509
        %v590 = vunpack.c.l.b16 %v510
        %v591 = vunpack.c.l.b16 %v511
        %v592 = vunpack.c.l.b16 %v512
        %v593 = vunpack.c.l.b16 %v513
        %v594 = vunpack.c.l.b16 %v514
        %v595 = vunpack.c.l.b16 %v515
        %v596 = vunpack.c.l.b16 %v516
        %v597 = vunpack.c.l.b16 %v517
        %v598 = vunpack.c.l.b16 %v518
        %v599 = vunpack.c.l.b16 %v519
        %v600 = vunpack.c.l.b16 %v520
        %v601 = vunpack.c.l.b16 %v521
        %v602 = vunpack.c.l.b16 %v522
        %v603 = vunpack.c.l.b16 %v523
        %v604 = vunpack.c.l.b16 %v524
        %v605 = vunpack.c.l.b16 %v525
        %v606 = vunpack.c.l.b16 %v526
        %v607 = vpack.c.b16 %v576, %v575
        %v608 = vpack.c.b16 %v578, %v577
        %v609 = vpack.c.b16 %v580, %v579
        %v610 = vpack.c.b16 %v582, %v581
        %v611 = vpack.c.b16 %v584, %v583
        %v612 = vpack.c.b16 %v586, %v585
        %v613 = vpack.c.b16 %v588, %v587
        %v614 = vpack.c.b16 %v590, %v589
        %v615 = vpack.c.b16 %v592, %v591
        %v616 = vpack.c.b16 %v594, %v593
        %v617 = vpack.c.b16 %v596, %v595
        %v618 = vpack.c.b16 %v598, %v597
        %v619 = vpack.c.b16 %v600, %v599
        %v620 = vpack.c.b16 %v602, %v601
        %v621 = vpack.c.b16 %v604, %v603
        %v622 = vpack.c.b16 %v606, %v605
        %v655 = vunpack.c.l.b16 %v527
        %v656 = vunpack.c.l.b16 %v528
        %v657 = vunpack.c.l.b16 %v529
        %v658 = vunpack.c.l.b16 %v530
        %v659 = vunpack.c.l.b16 %v531
        %v660 = vunpack.c.l.b16 %v532
        %v661 = vunpack.c.l.b16 %v533
        %v662 = vunpack.c.l.b16 %v534
        %v663 = vunpack.c.l.b16 %v535
        %v664 = vunpack.c.l.b16 %v536
        %v665 = vunpack.c.l.b16 %v537
        %v666 = vunpack.c.l.b16 %v538
        %v667 = vunpack.c.l.b16 %v539
        %v668 = vunpack.c.l.b16 %v540
        %v669 = vunpack.c.l.b16 %v541
        %v670 = vunpack.c.l.b16 %v542
        %v671 = vpack.c.b16 %v656, %v655
        %v672 = vpack.c.b16 %v658, %v657
        %v673 = vpack.c.b16 %v660, %v659
        %v674 = vpack.c.b16 %v662, %v661
        %v675 = vpack.c.b16 %v664, %v663
        %v676 = vpack.c.b16 %v666, %v665
        %v677 = vpack.c.b16 %v668, %v667
        %v678 = vpack.c.b16 %v670, %v669
        %687 = vmatpush.bf16.msra.mxu0 %v678
        %688 = vmatpush.bf16.msra.mxu0 %v677
        %689 = vmatpush.bf16.msra.mxu0 %v676
        %690 = vmatpush.bf16.msra.mxu0 %v675
        %691 = vmatpush.bf16.msra.mxu0 %v674
        %692 = vmatpush.bf16.msra.mxu0 %v673
        %693 = vmatpush.bf16.msra.mxu0 %v672
        %694 = vmatpush.bf16.msra.mxu0 %v671
        %695 = vmatmul.bf16.gmra.mxu0 %v607
        %v696 = vpop.f32.mrf.mxu0
        %v697 = vadd.f32 0.0, %v696
        %v698 = vpop.f32.mrf.mxu0
        %v699 = vadd.f32 0.0, %v698
        %700 = vmatmul.bf16.gmra.mxu0 %v608
        %v701 = vpop.f32.mrf.mxu0
        %v702 = vadd.f32 0.0, %v701
        %v703 = vpop.f32.mrf.mxu0
        %v704 = vadd.f32 0.0, %v703
        %705 = vmatmul.bf16.gmra.mxu0 %v609
        %v706 = vpop.f32.mrf.mxu0
        %v707 = vadd.f32 0.0, %v706
        %v708 = vpop.f32.mrf.mxu0
        %v709 = vadd.f32 0.0, %v708
        %710 = vmatmul.bf16.gmra.mxu0 %v610
        %v711 = vpop.f32.mrf.mxu0
        %v712 = vadd.f32 0.0, %v711
        %v713 = vpop.f32.mrf.mxu0
        %v714 = vadd.f32 0.0, %v713
        %715 = vmatmul.bf16.gmra.mxu0 %v611
        %v716 = vpop.f32.mrf.mxu0
        %v717 = vadd.f32 0.0, %v716
        %v718 = vpop.f32.mrf.mxu0
        %v719 = vadd.f32 0.0, %v718
        %720 = vmatmul.bf16.gmra.mxu0 %v612
        %v721 = vpop.f32.mrf.mxu0
        %v722 = vadd.f32 0.0, %v721
        %v723 = vpop.f32.mrf.mxu0
        %v724 = vadd.f32 0.0, %v723
        %725 = vmatmul.bf16.gmra.mxu0 %v613
        %v726 = vpop.f32.mrf.mxu0
        %v727 = vadd.f32 0.0, %v726
        %v728 = vpop.f32.mrf.mxu0
        %v729 = vadd.f32 0.0, %v728
        %730 = vmatmul.bf16.gmra.mxu0 %v614
        %v731 = vpop.f32.mrf.mxu0
        %v732 = vadd.f32 0.0, %v731
        %v733 = vpop.f32.mrf.mxu0
        %v734 = vadd.f32 0.0, %v733
        %735 = vmatmul.bf16.gmra.mxu0 %v615
        %v736 = vpop.f32.mrf.mxu0
        %v737 = vadd.f32 0.0, %v736
        %v738 = vpop.f32.mrf.mxu0
        %v739 = vadd.f32 0.0, %v738
        %740 = vmatmul.bf16.gmra.mxu0 %v616
        %v741 = vpop.f32.mrf.mxu0
        %v742 = vadd.f32 0.0, %v741
        %v743 = vpop.f32.mrf.mxu0
        %v744 = vadd.f32 0.0, %v743
        %745 = vmatmul.bf16.gmra.mxu0 %v617
        %v746 = vpop.f32.mrf.mxu0
        %v747 = vadd.f32 0.0, %v746
        %v748 = vpop.f32.mrf.mxu0
        %v749 = vadd.f32 0.0, %v748
        %750 = vmatmul.bf16.gmra.mxu0 %v618
        %v751 = vpop.f32.mrf.mxu0
        %v752 = vadd.f32 0.0, %v751
        %v753 = vpop.f32.mrf.mxu0
        %v754 = vadd.f32 0.0, %v753
        %755 = vmatmul.bf16.gmra.mxu0 %v619
        %v756 = vpop.f32.mrf.mxu0
        %v757 = vadd.f32 0.0, %v756
        %v758 = vpop.f32.mrf.mxu0
        %v759 = vadd.f32 0.0, %v758
        %760 = vmatmul.bf16.gmra.mxu0 %v620
        %v761 = vpop.f32.mrf.mxu0
        %v762 = vadd.f32 0.0, %v761
        %v763 = vpop.f32.mrf.mxu0
        %v764 = vadd.f32 0.0, %v763
        %765 = vmatmul.bf16.gmra.mxu0 %v621
        %v766 = vpop.f32.mrf.mxu0
        %v767 = vadd.f32 0.0, %v766
        %v768 = vpop.f32.mrf.mxu0
        %v769 = vadd.f32 0.0, %v768
        %770 = vmatmul.bf16.gmra.mxu0 %v622
        %v771 = vpop.f32.mrf.mxu0
        %v772 = vadd.f32 0.0, %v771
        %v773 = vpop.f32.mrf.mxu0
        %v774 = vadd.f32 0.0, %v773
        %775 = vdwg.mxu0
        %v776 = vadd.f32 %v463, %v697
        %v777 = vadd.f32 %v464, %v699
        %v778 = vadd.f32 %v465, %v702
        %v779 = vadd.f32 %v466, %v704
        %v780 = vadd.f32 %v467, %v707
        %v781 = vadd.f32 %v468, %v709
        %v782 = vadd.f32 %v469, %v712
        %v783 = vadd.f32 %v470, %v714
        %v784 = vadd.f32 %v471, %v717
        %v785 = vadd.f32 %v472, %v719
        %v786 = vadd.f32 %v473, %v722
        %v787 = vadd.f32 %v474, %v724
        %v788 = vadd.f32 %v475, %v727
        %v789 = vadd.f32 %v476, %v729
        %v790 = vadd.f32 %v477, %v732
        %v791 = vadd.f32 %v478, %v734
        %v792 = vadd.f32 %v479, %v737
        %v793 = vadd.f32 %v480, %v739
        %v794 = vadd.f32 %v481, %v742
        %v795 = vadd.f32 %v482, %v744
        %v796 = vadd.f32 %v483, %v747
        %v797 = vadd.f32 %v484, %v749
        %v798 = vadd.f32 %v485, %v752
        %v799 = vadd.f32 %v486, %v754
        %v800 = vadd.f32 %v487, %v757
        %v801 = vadd.f32 %v488, %v759
        %v802 = vadd.f32 %v489, %v762
        %v803 = vadd.f32 %v490, %v764
        %v804 = vadd.f32 %v491, %v767
        %v805 = vadd.f32 %v492, %v769
        %v806 = vadd.f32 %v493, %v772
        %v807 = vadd.f32 %v494, %v774
        %808 = vst [vmem:[#allocation2] sm:$0xff] %v776
        %809 = vst [vmem:[#allocation2 + $0x8] sm:$0xff] %v777
        %810 = vst [vmem:[#allocation2 + $0x10] sm:$0xff] %v778
        %811 = vst [vmem:[#allocation2 + $0x18] sm:$0xff] %v779
        %812 = vst [vmem:[#allocation2 + $0x20] sm:$0xff] %v780
        %813 = vst [vmem:[#allocation2 + $0x28] sm:$0xff] %v781
        %814 = vst [vmem:[#allocation2 + $0x30] sm:$0xff] %v782
        %815 = vst [vmem:[#allocation2 + $0x38] sm:$0xff] %v783
        %816 = vst [vmem:[#allocation2 + $0x40] sm:$0xff] %v784
        %817 = vst [vmem:[#allocation2 + $0x48] sm:$0xff] %v785
        %818 = vst [vmem:[#allocation2 + $0x50] sm:$0xff] %v786
        %819 = vst [vmem:[#allocation2 + $0x58] sm:$0xff] %v787
        %820 = vst [vmem:[#allocation2 + $0x60] sm:$0xff] %v788
        %821 = vst [vmem:[#allocation2 + $0x68] sm:$0xff] %v789
        %822 = vst [vmem:[#allocation2 + $0x70] sm:$0xff] %v790
        %823 = vst [vmem:[#allocation2 + $0x78] sm:$0xff] %v791
        %824 = vst [vmem:[#allocation2 + $0x80] sm:$0xff] %v792
        %825 = vst [vmem:[#allocation2 + $0x88] sm:$0xff] %v793
        %826 = vst [vmem:[#allocation2 + $0x90] sm:$0xff] %v794
        %827 = vst [vmem:[#allocation2 + $0x98] sm:$0xff] %v795
        %828 = vst [vmem:[#allocation2 + $0xa0] sm:$0xff] %v796
        %829 = vst [vmem:[#allocation2 + $0xa8] sm:$0xff] %v797
        %830 = vst [vmem:[#allocation2 + $0xb0] sm:$0xff] %v798
        %831 = vst [vmem:[#allocation2 + $0xb8] sm:$0xff] %v799
        %832 = vst [vmem:[#allocation2 + $0xc0] sm:$0xff] %v800
        %833 = vst [vmem:[#allocation2 + $0xc8] sm:$0xff] %v801
        %834 = vst [vmem:[#allocation2 + $0xd0] sm:$0xff] %v802
        %835 = vst [vmem:[#allocation2 + $0xd8] sm:$0xff] %v803
        %836 = vst [vmem:[#allocation2 + $0xe0] sm:$0xff] %v804
        %837 = vst [vmem:[#allocation2 + $0xe8] sm:$0xff] %v805
        %838 = vst [vmem:[#allocation2 + $0xf0] sm:$0xff] %v806
        %839 = vst [vmem:[#allocation2 + $0xf8] sm:$0xff] %v807
        %p840 = scmp.eq.s32.totalorder %s21, 1
        // Predicated region
        $region74: #{basic_conv_forward.2} parent=64 // pred_check
          %p841 = pneg %p840
        $region75: #{basic_conv_forward.2} parent=64 // pred_check_branch
          %843 = sbr.rel (%p841) target = $region77
        $region76: #{basic_conv_forward.2} parent=64 // pred_region
          %v844 = vld [vmem:[#allocation2] sm:$0xff]
          %v845 = vld [vmem:[#allocation2 + $0x8] sm:$0xff]
          %v846 = vld [vmem:[#allocation2 + $0x10] sm:$0xff]
          %v847 = vld [vmem:[#allocation2 + $0x18] sm:$0xff]
          %v848 = vld [vmem:[#allocation2 + $0x20] sm:$0xff]
          %v849 = vld [vmem:[#allocation2 + $0x28] sm:$0xff]
          %v850 = vld [vmem:[#allocation2 + $0x30] sm:$0xff]
          %v851 = vld [vmem:[#allocation2 + $0x38] sm:$0xff]
          %v852 = vld [vmem:[#allocation2 + $0x40] sm:$0xff]
          %v853 = vld [vmem:[#allocation2 + $0x48] sm:$0xff]
          %v854 = vld [vmem:[#allocation2 + $0x50] sm:$0xff]
          %v855 = vld [vmem:[#allocation2 + $0x58] sm:$0xff]
          %v856 = vld [vmem:[#allocation2 + $0x60] sm:$0xff]
          %v857 = vld [vmem:[#allocation2 + $0x68] sm:$0xff]
          %v858 = vld [vmem:[#allocation2 + $0x70] sm:$0xff]
          %v859 = vld [vmem:[#allocation2 + $0x78] sm:$0xff]
          %v860 = vld [vmem:[#allocation2 + $0x80] sm:$0xff]
          %v861 = vld [vmem:[#allocation2 + $0x88] sm:$0xff]
          %v862 = vld [vmem:[#allocation2 + $0x90] sm:$0xff]
          %v863 = vld [vmem:[#allocation2 + $0x98] sm:$0xff]
          %v864 = vld [vmem:[#allocation2 + $0xa0] sm:$0xff]
          %v865 = vld [vmem:[#allocation2 + $0xa8] sm:$0xff]
          %v866 = vld [vmem:[#allocation2 + $0xb0] sm:$0xff]
          %v867 = vld [vmem:[#allocation2 + $0xb8] sm:$0xff]
          %v868 = vld [vmem:[#allocation2 + $0xc0] sm:$0xff]
          %v869 = vld [vmem:[#allocation2 + $0xc8] sm:$0xff]
          %v870 = vld [vmem:[#allocation2 + $0xd0] sm:$0xff]
          %v871 = vld [vmem:[#allocation2 + $0xd8] sm:$0xff]
          %v872 = vld [vmem:[#allocation2 + $0xe0] sm:$0xff]
          %v873 = vld [vmem:[#allocation2 + $0xe8] sm:$0xff]
          %v874 = vld [vmem:[#allocation2 + $0xf0] sm:$0xff]
          %v875 = vld [vmem:[#allocation2 + $0xf8] sm:$0xff]
          %876 = vst [vmem:[%s417] sm:$0xff] %v844
          %877 = vst [vmem:[%s417 + $0x8] sm:$0xff] %v845
          %878 = vst [vmem:[%s417 + $0x10] sm:$0xff] %v846
          %879 = vst [vmem:[%s417 + $0x18] sm:$0xff] %v847
          %880 = vst [vmem:[%s417 + $0x20] sm:$0xff] %v848
          %881 = vst [vmem:[%s417 + $0x28] sm:$0xff] %v849
          %882 = vst [vmem:[%s417 + $0x30] sm:$0xff] %v850
          %883 = vst [vmem:[%s417 + $0x38] sm:$0xff] %v851
          %884 = vst [vmem:[%s417 + $0x40] sm:$0xff] %v852
          %885 = vst [vmem:[%s417 + $0x48] sm:$0xff] %v853
          %886 = vst [vmem:[%s417 + $0x50] sm:$0xff] %v854
          %887 = vst [vmem:[%s417 + $0x58] sm:$0xff] %v855
          %888 = vst [vmem:[%s417 + $0x60] sm:$0xff] %v856
          %889 = vst [vmem:[%s417 + $0x68] sm:$0xff] %v857
          %890 = vst [vmem:[%s417 + $0x70] sm:$0xff] %v858
          %891 = vst [vmem:[%s417 + $0x78] sm:$0xff] %v859
          %892 = vst [vmem:[%s417 + $0x80] sm:$0xff] %v860
          %893 = vst [vmem:[%s417 + $0x88] sm:$0xff] %v861
          %894 = vst [vmem:[%s417 + $0x90] sm:$0xff] %v862
          %895 = vst [vmem:[%s417 + $0x98] sm:$0xff] %v863
          %896 = vst [vmem:[%s417 + $0xa0] sm:$0xff] %v864
          %897 = vst [vmem:[%s417 + $0xa8] sm:$0xff] %v865
          %898 = vst [vmem:[%s417 + $0xb0] sm:$0xff] %v866
          %899 = vst [vmem:[%s417 + $0xb8] sm:$0xff] %v867
          %900 = vst [vmem:[%s417 + $0xc0] sm:$0xff] %v868
          %901 = vst [vmem:[%s417 + $0xc8] sm:$0xff] %v869
          %902 = vst [vmem:[%s417 + $0xd0] sm:$0xff] %v870
          %903 = vst [vmem:[%s417 + $0xd8] sm:$0xff] %v871
          %904 = vst [vmem:[%s417 + $0xe0] sm:$0xff] %v872
          %905 = vst [vmem:[%s417 + $0xe8] sm:$0xff] %v873
          %906 = vst [vmem:[%s417 + $0xf0] sm:$0xff] %v874
          %907 = vst [vmem:[%s417 + $0xf8] sm:$0xff] %v875
          %v908 = vadd.f32 %v844, %v845
          %v909 = vadd.f32 %v908, %v846
          %v910 = vadd.f32 %v909, %v847
          %v911 = vadd.f32 %v910, %v848
          %v912 = vadd.f32 %v911, %v849
          %v913 = vadd.f32 %v912, %v850
          %v914 = vadd.f32 %v913, %v851
          %v915 = vadd.f32 %v914, %v852
          %v916 = vadd.f32 %v915, %v853
          %v917 = vadd.f32 %v916, %v854
          %v918 = vadd.f32 %v917, %v855
          %v919 = vadd.f32 %v918, %v856
          %v920 = vadd.f32 %v919, %v857
          %v921 = vadd.f32 %v920, %v858
          %v922 = vadd.f32 %v921, %v859
          %v923 = vadd.f32 %v922, %v860
          %v924 = vadd.f32 %v923, %v861
          %v925 = vadd.f32 %v924, %v862
          %v926 = vadd.f32 %v925, %v863
          %v927 = vadd.f32 %v926, %v864
          %v928 = vadd.f32 %v927, %v865
          %v929 = vadd.f32 %v928, %v866
          %v930 = vadd.f32 %v929, %v867
          %v931 = vadd.f32 %v930, %v868
          %v932 = vadd.f32 %v931, %v869
          %v933 = vadd.f32 %v932, %v870
          %v934 = vadd.f32 %v933, %v871
          %v935 = vadd.f32 %v934, %v872
          %v936 = vadd.f32 %v935, %v873
          %v937 = vadd.f32 %v936, %v874
          %v938 = vadd.f32 %v937, %v875
          %v939 = vrot.slane %v938, 4
          %v940 = vadd.f32 %v938, %v939
          %v941 = vrot.slane %v940, 2
          %v942 = vadd.f32 %v940, %v941
          %v943 = vrot.slane %v942, 1
          %v944 = vadd.f32 %v942, %v943
          %v945 = vmul.f32 %v844, %v844
          %v946 = vmul.f32 %v845, %v845
          %v947 = vmul.f32 %v846, %v846
          %v948 = vmul.f32 %v847, %v847
          %v949 = vmul.f32 %v848, %v848
          %v950 = vmul.f32 %v849, %v849
          %v951 = vmul.f32 %v850, %v850
          %v952 = vmul.f32 %v851, %v851
          %v953 = vmul.f32 %v852, %v852
          %v954 = vmul.f32 %v853, %v853
          %v955 = vmul.f32 %v854, %v854
          %v956 = vmul.f32 %v855, %v855
          %v957 = vmul.f32 %v856, %v856
          %v958 = vmul.f32 %v857, %v857
          %v959 = vmul.f32 %v858, %v858
          %v960 = vmul.f32 %v859, %v859
          %v961 = vmul.f32 %v860, %v860
          %v962 = vmul.f32 %v861, %v861
          %v963 = vmul.f32 %v862, %v862
          %v964 = vmul.f32 %v863, %v863
          %v965 = vmul.f32 %v864, %v864
          %v966 = vmul.f32 %v865, %v865
          %v967 = vmul.f32 %v866, %v866
          %v968 = vmul.f32 %v867, %v867
          %v969 = vmul.f32 %v868, %v868
          %v970 = vmul.f32 %v869, %v869
          %v971 = vmul.f32 %v870, %v870
          %v972 = vmul.f32 %v871, %v871
          %v973 = vmul.f32 %v872, %v872
          %v974 = vmul.f32 %v873, %v873
          %v975 = vmul.f32 %v874, %v874
          %v976 = vmul.f32 %v875, %v875
          %v977 = vadd.f32 %v945, %v946
          %v978 = vadd.f32 %v977, %v947
          %v979 = vadd.f32 %v978, %v948
          %v980 = vadd.f32 %v979, %v949
          %v981 = vadd.f32 %v980, %v950
          %v982 = vadd.f32 %v981, %v951
          %v983 = vadd.f32 %v982, %v952
          %v984 = vadd.f32 %v983, %v953
          %v985 = vadd.f32 %v984, %v954
          %v986 = vadd.f32 %v985, %v955
          %v987 = vadd.f32 %v986, %v956
          %v988 = vadd.f32 %v987, %v957
          %v989 = vadd.f32 %v988, %v958
          %v990 = vadd.f32 %v989, %v959
          %v991 = vadd.f32 %v990, %v960
          %v992 = vadd.f32 %v991, %v961
          %v993 = vadd.f32 %v992, %v962
          %v994 = vadd.f32 %v993, %v963
          %v995 = vadd.f32 %v994, %v964
          %v996 = vadd.f32 %v995, %v965
          %v997 = vadd.f32 %v996, %v966
          %v998 = vadd.f32 %v997, %v967
          %v999 = vadd.f32 %v998, %v968
          %v1000 = vadd.f32 %v999, %v969
          %v1001 = vadd.f32 %v1000, %v970
          %v1002 = vadd.f32 %v1001, %v971
          %v1003 = vadd.f32 %v1002, %v972
          %v1004 = vadd.f32 %v1003, %v973
          %v1005 = vadd.f32 %v1004, %v974
          %v1006 = vadd.f32 %v1005, %v975
          %v1007 = vadd.f32 %v1006, %v976
          %v1008 = vrot.slane %v1007, 4
          %v1009 = vadd.f32 %v1007, %v1008
          %v1010 = vrot.slane %v1009, 2
          %v1011 = vadd.f32 %v1009, %v1010
          %v1012 = vrot.slane %v1011, 1
          %v1013 = vadd.f32 %v1011, %v1012
          %1014 = vst [vmem:[%s422] sm:$0xff] %v944
          %1015 = vst [vmem:[%s426] sm:$0xff] %v1013
        $region77: #{basic_conv_forward.2} parent=64 // pred_fallthru
          _
        %s1016 = smul.u32 32, %s20
        %p1017 = scmp.lt.s32.totalorder %s1016, 63
        %s1018 = scalar_select %p1017, %s1016, 63
        %s1019 = smul.addr %s1018, 8
        %s1020 = scalar_lea.vmem %s2, %s1019
        %p1021 = scmp.lt.s32.totalorder %s20, 1
        %s1022 = scalar_select %p1021, %s20, 1
        %s1023 = smul.addr %s1022, 8
        %s1024 = scalar_lea.vmem %s3, %s1023
        %p1025 = scmp.lt.s32.totalorder %s20, 1
        %s1026 = scalar_select %p1025, %s20, 1
        %s1027 = smul.addr %s1026, 8
        %s1028 = scalar_lea.vmem %s4, %s1027
        // Predicated region
        $region78: #{basic_conv_forward.2} parent=64 // pred_check
          %p1029 = pneg %p100
        $region79: #{basic_conv_forward.2} parent=64 // pred_check_branch
          %1031 = sbr.rel (%p1029) target = $region81
        $region80: #{basic_conv_forward.2} parent=64 // pred_region
          %s1032 = smul.u32 32, %s20
        $region81: #{basic_conv_forward.2} parent=64 // pred_fallthru
          _
        // Predicated region
        $region82: #{basic_conv_forward.2} parent=64 // pred_check
          %p1033 = pneg %p126
        $region83: #{basic_conv_forward.2} parent=64 // pred_check_branch
          %1035 = sbr.rel (%p1033) target = $region85
        $region84: #{basic_conv_forward.2} parent=64 // pred_region
          _
        $region85: #{basic_conv_forward.2} parent=64 // pred_fallthru
          _
        // Predicated region
        $region86: #{basic_conv_forward.2} parent=64 // pred_check
          %p1036 = pneg %p152
        $region87: #{basic_conv_forward.2} parent=64 // pred_check_branch
          %1038 = sbr.rel (%p1036) target = $region89
        $region88: #{basic_conv_forward.2} parent=64 // pred_region
          _
        $region89: #{basic_conv_forward.2} parent=64 // pred_fallthru
          _
      $region65: #{basic_conv_forward.2} parent=5 // pred_fallthru
        _
      %p1039 = scmp.le.s32.totalorder 2, %s11
      // Predicated region
      $region90: #{basic_conv_forward.2} parent=5 // pred_check
        %p1040 = pneg %p1039
      $region91: #{basic_conv_forward.2} parent=5 // pred_check_branch
        %1042 = sbr.rel (%p1040) target = $region93
      $region92: #{basic_conv_forward.2} parent=5 // pred_region
        %s1043 = ssub.s32 %s11, 2
        // Predicated region
        $region94: #{basic_conv_forward.2} parent=92 // pred_check
          %p1044 = pneg %p106
        $region95: #{basic_conv_forward.2} parent=92 // pred_check_branch
          %1046 = sbr.rel (%p1044) target = $region97
        $region96: #{basic_conv_forward.2} parent=92 // pred_region
          %s1047 = smul.u32 32, %s22
          %p1048 = scmp.lt.s32.totalorder %s1047, 63
          %s1049 = scalar_select %p1048, %s1047, 63
          %s1050 = smul.addr %s1049, 8
          %s1051 = scalar_lea.vmem %s2, %s1050
        $region97: #{basic_conv_forward.2} parent=92 // pred_fallthru
          _
        // Predicated region
        $region98: #{basic_conv_forward.2} parent=92 // pred_check
          %p1052 = pneg %p132
        $region99: #{basic_conv_forward.2} parent=92 // pred_check_branch
          %1054 = sbr.rel (%p1052) target = $region101
        $region100: #{basic_conv_forward.2} parent=92 // pred_region
          %p1055 = scmp.lt.s32.totalorder %s22, 1
          %s1056 = scalar_select %p1055, %s22, 1
          %s1057 = smul.addr %s1056, 8
          %s1058 = scalar_lea.vmem %s3, %s1057
        $region101: #{basic_conv_forward.2} parent=92 // pred_fallthru
          _
        // Predicated region
        $region102: #{basic_conv_forward.2} parent=92 // pred_check
          %p1059 = pneg %p158
        $region103: #{basic_conv_forward.2} parent=92 // pred_check_branch
          %1061 = sbr.rel (%p1059) target = $region105
        $region104: #{basic_conv_forward.2} parent=92 // pred_region
          %p1062 = scmp.lt.s32.totalorder %s22, 1
          %s1063 = scalar_select %p1062, %s22, 1
          %s1064 = smul.addr %s1063, 8
          %s1065 = scalar_lea.vmem %s4, %s1064
        $region105: #{basic_conv_forward.2} parent=92 // pred_fallthru
          _
      $region93: #{basic_conv_forward.2} parent=5 // pred_fallthru
        _
    $region6: #{basic_conv_forward.2} parent=1 // loop_footer
      %s15 = sadd.s32 1, %s11
    $region7: #{basic_conv_forward.2} parent=1 // loop_footer_branch
      %10 = sbr.rel target = $region3
    $region8: #{basic_conv_forward.2} parent=1 // loop_exit
      _

</llo_original>
